<compile_context>
chip_gen: v6e
topology: v6e:2x2x1
jax: 0.10.0
libtpu: 0.0.40
codegen_flags: <defaults>
</compile_context>

<pallas_src>
import functools

import jax
import jax.numpy as jnp
from jax import lax
from jax.experimental import pallas as pl
from jax.experimental.pallas import tpu as pltpu

NEG_SLOPE = 0.2            # PyG GATConv default LeakyReLU negative slope
NEG_INF = -1e30            # masked logit; safe because self-loops guarantee >=1 edge/row
MXU_DTYPE = jnp.bfloat16   # matmul-input / resident-h dtype (accumulation stays f32)


def _round_up(x, m):
    return (x + m - 1) // m * m


# ---------------------------------------------------------------------------
# Kernel: one grid step = one strip of `row_tile` target rows of both graphs.
# ---------------------------------------------------------------------------
def _fusion_kernel(bias_ref, ek_ref, eu_ref, adjk_ref, adju_ref, wk_ref, wu_ref,
                   attn_ref, fc_ref, outk_ref, outu_ref, hk_ref, hu_ref,
                   *, exer_n, n_ek, n_eu, feat, row_tile):
    D = feat
    i = pl.program_id(0)
    r0 = pl.multiple_of(i * row_tile, row_tile)

    # Project every node once (h = x @ [W_a | W_b]) and keep it resident in
    # VMEM scratch for all later row tiles.  bf16 inputs keep the MXU on its
    # fast path on v6e/v7x; accumulation is f32.
    @pl.when(i == 0)
    def _():
        hk_ref[...] = jnp.dot(ek_ref[...].astype(MXU_DTYPE),
                              wk_ref[...].astype(MXU_DTYPE),
                              preferred_element_type=jnp.float32).astype(hk_ref.dtype)
        hu_ref[...] = jnp.dot(eu_ref[...].astype(MXU_DTYPE),
                              wu_ref[...].astype(MXU_DTYPE),
                              preferred_element_type=jnp.float32).astype(hu_ref.dtype)

    attn = attn_ref[...]                          # (12, D): a_src, a_dst, bias per GAT

    def gat_rows(h_t, h_s, adj_t, g):
        # Dense single-head GATConv restricted to this strip's target rows.
        #   h_t  : (row_tile, D) projected target rows
        #   h_s  : (n_src, D)    projected source rows (real nodes only)
        #   adj_t: (row_tile, n_src) int8 mask, adj[target, source] (self-loops incl.)
        a_src = attn[3 * g + 0:3 * g + 1, :]                         # (1, D)
        a_dst = attn[3 * g + 1:3 * g + 2, :]                         # (1, D)
        bias = attn[3 * g + 2:3 * g + 3, :]                          # (1, D)
        # destination score on the VPU (broadcast-mul + lane reduce)
        s_dst = jnp.sum(h_t.astype(jnp.float32) * a_dst, axis=-1, keepdims=True)
        # source scores as a (1, n_src) row straight off the MXU (A @ B^T form)
        s_src = lax.dot_general(a_src.astype(h_s.dtype), h_s,
                                (((1,), (1,)), ((), ())),
                                preferred_element_type=jnp.float32)
        e = s_dst + s_src                                            # (row_tile, n_src)
        e = jnp.where(e > 0, e, NEG_SLOPE * e)                       # LeakyReLU
        e = jnp.where(adj_t.astype(jnp.float32) > 0.0, e, NEG_INF)   # mask non-edges
        m = jnp.max(e, axis=-1, keepdims=True)
        p = jnp.exp(e - m)
        alpha = p * pl.reciprocal(jnp.sum(p, axis=-1, keepdims=True), approx=True)
        out = jnp.dot(alpha.astype(h_s.dtype), h_s,
                      preferred_element_type=jnp.float32)
        return out + bias                                            # (row_tile, D) f32

    hk_t = hk_ref[pl.ds(r0, row_tile), :]        # (row_tile, 2D) target rows
    hu_t = hu_ref[pl.ds(r0, row_tile), :]
    hk_s = hk_ref[0:n_ek, :]                     # (n_ek, 2D) real source rows
    hu_s = hu_ref[0:n_eu, :]

    ko = gat_rows(hk_t[:, :D], hk_s[:, :D], adjk_ref[0], 0)   # k_from_e rows
    bo = gat_rows(hk_t[:, D:], hk_s[:, D:], adjk_ref[1], 1)   # e_from_k rows
    uo = gat_rows(hu_t[:, :D], hu_s[:, :D], adju_ref[0], 2)   # u_from_e rows
    co = gat_rows(hu_t[:, D:], hu_s[:, D:], adju_ref[1], 3)   # e_from_u rows

    xk_t = ek_ref[pl.ds(r0, row_tile), :]        # raw e_k rows (exercise / knowledge)
    xu_t = eu_ref[pl.ds(r0, row_tile), :]        # raw e_u rows (exercise / student)

    # exercise branch: 2-way softmax between the two learned scores (all VPU)
    fc = fc_ref[...]
    w1a, w1b, w2a, w2c = fc[0:1, :], fc[1:2, :], fc[2:3, :], fc[3:4, :]
    b1, b2 = bias_ref[0], bias_ref[1]
    s1 = jnp.sum(xk_t * w1a + bo * w1b, axis=-1, keepdims=True) + b1
    s2 = jnp.sum(xk_t * w2a + co * w2c, axis=-1, keepdims=True) + b2
    ms = jnp.maximum(s1, s2)
    p1 = jnp.exp(s1 - ms)
    p2 = jnp.exp(s2 - ms)
    inv = pl.reciprocal(p1 + p2, approx=True)
    ex_delta = (p1 * inv) * bo + (p2 * inv) * co

    # knowledge branch: F.softmax over the single k_attn_fc3 logit is exactly
    # 1.0, so kn_out = kn_in + k_from_e (w3/b3 provably cannot affect it).
    rows = r0 + lax.broadcasted_iota(jnp.int32, (row_tile, 1), 0)
    is_ex = rows < exer_n
    outk_ref[...] = (xk_t + jnp.where(is_ex, ex_delta, ko)).astype(outk_ref.dtype)
    # student branch (rows < exer_n of out_u are padding, dropped by the wrapper)
    outu_ref[...] = (xu_t + uo).astype(outu_ref.dtype)


# ---------------------------------------------------------------------------
# Wrapper: pack per-model constants ONCE, return a forward() closure.
# ---------------------------------------------------------------------------
def build_fusion(params, adj_masks, *, exer_n, row_tile=128):
    D = params["k_from_e"][0].shape[0]
    n_ek = adj_masks["k_from_e"].shape[0]      # exer_n + knowledge_n
    n_eu = adj_masks["u_from_e"].shape[0]      # exer_n + student_n
    assert row_tile % 8 == 0, "row_tile must be a multiple of 8"
    n_rows_pad = _round_up(max(n_ek, n_eu), row_tile)
    num_tiles = n_rows_pad // row_tile

    # int8 adjacency, per-graph source width, pre-tiled over target rows:
    # (num_tiles, 2, row_tile, n_src); the tiled axis is leading so every
    # blocked dim equals its array dim (no (8,128)/dtype tiling constraints).
    def tile_adj(names, n_src):
        a = jnp.stack([adj_masks[n] for n in names])                  # (2, n_src, n_src)
        a = jnp.pad(a, ((0, 0), (0, n_rows_pad - a.shape[1]), (0, 0)))
        a = a.reshape(2, num_tiles, row_tile, n_src).transpose(1, 0, 2, 3)
        return a.astype(jnp.int8)

    adjk = tile_adj(("k_from_e", "e_from_k"), n_ek)
    adju = tile_adj(("u_from_e", "e_from_u"), n_eu)

    # fuse the two GATs sharing an input into one (D, 2D) projection each
    wk = jnp.concatenate([params["k_from_e"][0], params["e_from_k"][0]], axis=1)
    wu = jnp.concatenate([params["u_from_e"][0], params["e_from_u"][0]], axis=1)

    order = ("k_from_e", "e_from_k", "u_from_e", "e_from_u")
    attn_rows = []
    for name in order:
        _, a_src, a_dst, bias = params[name]
        attn_rows += [a_src, a_dst, bias]
    attn_slab = jnp.stack(attn_rows).astype(jnp.float32)              # (12, D)

    fc_slab = jnp.stack([params["w1"][0, :D], params["w1"][0, D:],
                         params["w2"][0, :D], params["w2"][0, D:]]).astype(jnp.float32)
    bias_fc = jnp.stack([params["b1"][0], params["b2"][0]]).astype(jnp.float32)  # (2,)
    # params["w3"] / params["b3"] intentionally unused (see kernel comment).

    kernel = functools.partial(_fusion_kernel, exer_n=exer_n, n_ek=n_ek,
                               n_eu=n_eu, feat=D, row_tile=row_tile)

    in_specs = [
        pl.BlockSpec(memory_space=pltpu.MemorySpace.SMEM),                   # b1, b2
        pl.BlockSpec((n_rows_pad, D), lambda i: (0, 0)),                     # e_k (resident)
        pl.BlockSpec((n_rows_pad, D), lambda i: (0, 0)),                     # e_u (resident)
        pl.BlockSpec((None, 2, row_tile, n_ek), lambda i: (i, 0, 0, 0)),     # adj strips (e_k)
        pl.BlockSpec((None, 2, row_tile, n_eu), lambda i: (i, 0, 0, 0)),     # adj strips (e_u)
        pl.BlockSpec((D, 2 * D), lambda i: (0, 0)),                          # wk
        pl.BlockSpec((D, 2 * D), lambda i: (0, 0)),                          # wu
        pl.BlockSpec((12, D), lambda i: (0, 0)),                             # attn
        pl.BlockSpec((4, D), lambda i: (0, 0)),                              # fc
    ]
    out_specs = (pl.BlockSpec((row_tile, D), lambda i: (i, 0)),
                 pl.BlockSpec((row_tile, D), lambda i: (i, 0)))
    out_shape = (jax.ShapeDtypeStruct((n_rows_pad, D), jnp.float32),
                 jax.ShapeDtypeStruct((n_rows_pad, D), jnp.float32))
    scratch_shapes = [pltpu.VMEM((n_rows_pad, 2 * D), MXU_DTYPE),
                      pltpu.VMEM((n_rows_pad, 2 * D), MXU_DTYPE)]

    # explicit VMEM budget (v7x has only 64 MiB physical)
    h_bytes = jnp.dtype(MXU_DTYPE).itemsize
    vmem_est = (2 * n_rows_pad * D * 4                 # resident e_k, e_u (f32)
                + 2 * n_rows_pad * 2 * D * h_bytes     # resident h scratch
                + 2 * 2 * row_tile * (n_ek + n_eu)     # int8 adj strips, double-buffered
                + 2 * 2 * row_tile * D * 4             # output strips, double-buffered
                + 2 * D * 2 * D * 4 + 16 * D * 4 + 64) # weights / attn / fc / scalars
    vmem_limit = int(min(max(2 * vmem_est + (2 << 20), 16 << 20), 64 << 20))

    flops = int(2 * (n_ek + n_eu) * D * 2 * D
                + 4 * n_rows_pad * (n_ek + n_eu) * (2 * D + 4))
    transcendentals = int(2 * n_rows_pad * (n_ek + n_eu) + 4 * n_rows_pad)
    bytes_accessed = int(adjk.size + adju.size + 4 * n_rows_pad * D * 4
                         + (wk.size + wu.size + attn_slab.size + fc_slab.size) * 4)

    call = pl.pallas_call(
        kernel,
        grid=(num_tiles,),
        in_specs=in_specs,
        out_specs=out_specs,
        out_shape=out_shape,
        scratch_shapes=scratch_shapes,
        compiler_params=pltpu.CompilerParams(
            dimension_semantics=("arbitrary",),      # see TODO(synk) in header
            vmem_limit_bytes=vmem_limit),
        cost_estimate=pl.CostEstimate(flops=flops,
                                      transcendentals=transcendentals,
                                      bytes_accessed=bytes_accessed),
    )

    def forward(kn_emb, exer_emb, all_stu_emb):
        e_k = jnp.concatenate([exer_emb, kn_emb], axis=0)
        e_u = jnp.concatenate([exer_emb, all_stu_emb], axis=0)
        ek_p = jnp.pad(e_k, ((0, n_rows_pad - n_ek), (0, 0)))
        eu_p = jnp.pad(e_u, ((0, n_rows_pad - n_eu), (0, 0)))
        out_k, out_u = call(bias_fc, ek_p, eu_p, adjk, adju, wk, wu,
                            attn_slab, fc_slab)
        return out_k[exer_n:n_ek], out_k[:exer_n], out_u[exer_n:n_eu]

    return forward


# ---------------------------------------------------------------------------
# Pure-JAX reference (matches the PyTorch module incl. w3/b3) for sanity check
# ---------------------------------------------------------------------------
def gat_ref(x, W, a_src, a_dst, bias, adj):
    hp = jax.lax.Precision.HIGHEST
    h = jnp.dot(x, W, precision=hp)
    s_dst = jnp.dot(h, a_dst.reshape(-1, 1), precision=hp)
    s_src = jnp.dot(h, a_src.reshape(-1, 1), precision=hp).T
    e = s_dst + s_src
    e = jnp.where(e > 0, e, NEG_SLOPE * e)
    e = jnp.where(adj > 0, e, NEG_INF)
    alpha = jax.nn.softmax(e, axis=-1)
    return jnp.dot(alpha, h, precision=hp) + bias.reshape(1, -1)


def forward_ref(params, adj, kn_emb, exer_emb, all_stu_emb):
    hp = jax.lax.Precision.HIGHEST
    exer_n = exer_emb.shape[0]
    e_k = jnp.concatenate([exer_emb, kn_emb], axis=0)
    e_u = jnp.concatenate([exer_emb, all_stu_emb], axis=0)
    k_from_e = gat_ref(e_k, *params["k_from_e"], adj["k_from_e"])
    e_from_k = gat_ref(e_k, *params["e_from_k"], adj["e_from_k"])
    u_from_e = gat_ref(e_u, *params["u_from_e"], adj["u_from_e"])
    e_from_u = gat_ref(e_u, *params["e_from_u"], adj["e_from_u"])

    A, Dm = kn_emb, k_from_e[exer_n:]
    s3 = jnp.dot(jnp.concatenate([A, Dm], axis=1), params["w3"].T, precision=hp) + params["b3"]
    kn_out = A + jax.nn.softmax(s3, axis=1)[:, 0:1] * Dm

    Ae, Bm, Cm = exer_emb, e_from_k[:exer_n], e_from_u[:exer_n]
    s1 = jnp.dot(jnp.concatenate([Ae, Bm], axis=1), params["w1"].T, precision=hp) + params["b1"]
    s2 = jnp.dot(jnp.concatenate([Ae, Cm], axis=1), params["w2"].T, precision=hp) + params["b2"]
    score = jax.nn.softmax(jnp.concatenate([s1, s2], axis=1), axis=1)
    ex_out = Ae + score[:, 0:1] * Bm + score[:, 1:2] * Cm

    st_out = all_stu_emb + u_from_e[exer_n:]
    return kn_out, ex_out, st_out


def make_adj(n, src, dst):
    adj = jnp.zeros((n, n), jnp.float32)
    adj = adj.at[jnp.array(dst), jnp.array(src)].set(1.0)   # adj[target, source]
    return jnp.maximum(adj, jnp.eye(n, dtype=jnp.float32))  # PyG add_self_loops


if __name__ == "__main__":
    student_n, exer_n, knowledge_n = 4, 6, 8  # exer_n = 6 is hard-coded in forward()
    key = jax.random.PRNGKey(0)
    ks = jax.random.split(key, 32)

    def gat_params(k0, k1, k2, k3, d):
        return (0.3 * jax.random.normal(k0, (d, d), jnp.float32),
                0.3 * jax.random.normal(k1, (d,), jnp.float32),
                0.3 * jax.random.normal(k2, (d,), jnp.float32),
                0.1 * jax.random.normal(k3, (d,), jnp.float32))

    params = {
        "k_from_e": gat_params(ks[0], ks[1], ks[2], ks[3], knowledge_n),
        "e_from_k": gat_params(ks[4], ks[5], ks[6], ks[7], knowledge_n),
        "u_from_e": gat_params(ks[8], ks[9], ks[10], ks[11], knowledge_n),
        "e_from_u": gat_params(ks[12], ks[13], ks[14], ks[15], knowledge_n),
        "w3": 0.3 * jax.random.normal(ks[16], (1, 2 * knowledge_n), jnp.float32),
        "b3": 0.1 * jax.random.normal(ks[17], (1,), jnp.float32),
        "w1": 0.3 * jax.random.normal(ks[18], (1, 2 * knowledge_n), jnp.float32),
        "b1": 0.1 * jax.random.normal(ks[19], (1,), jnp.float32),
        "w2": 0.3 * jax.random.normal(ks[20], (1, 2 * knowledge_n), jnp.float32),
        "b2": 0.1 * jax.random.normal(ks[21], (1,), jnp.float32),
    }

    # deterministic synthetic graphs (edge lists -> dense masks)
    n_ek = exer_n + knowledge_n
    n_eu = exer_n + student_n
    src_ke, dst_ke, src_ek, dst_ek = [], [], [], []
    for i in range(exer_n):
        for t in (i % knowledge_n, (3 * i + 1) % knowledge_n):
            src_ke.append(i); dst_ke.append(exer_n + t)            # e -> k
    for kk in range(knowledge_n):
        src_ek.append(exer_n + kk); dst_ek.append(kk % exer_n)     # k -> e
    src_ue, dst_ue, src_eu, dst_eu = [], [], [], []
    for i in range(exer_n):
        src_ue.append(i); dst_ue.append(exer_n + (i % student_n))  # e -> u
    for s in range(student_n):
        for t in (s % exer_n, (s + 2) % exer_n):
            src_eu.append(exer_n + s); dst_eu.append(t)            # u -> e

    adj = {
        "k_from_e": make_adj(n_ek, src_ke, dst_ke),
        "e_from_k": make_adj(n_ek, src_ek, dst_ek),
        "u_from_e": make_adj(n_eu, src_ue, dst_ue),
        "e_from_u": make_adj(n_eu, src_eu, dst_eu),
    }

    kn_emb = jax.random.normal(ks[22], (knowledge_n, knowledge_n), jnp.float32)
    exer_emb = jax.random.normal(ks[23], (exer_n, knowledge_n), jnp.float32)
    all_stu_emb = jax.random.normal(ks[24], (student_n, knowledge_n), jnp.float32)

    # row_tile=8 so the toy problem (14 padded to 16 rows) exercises a 2-step
    # grid (resident-h reuse across tiles); use 128 for realistic sizes.
    fusion = build_fusion(params, adj, exer_n=exer_n, row_tile=8)
    kn_o, ex_o, st_o = fusion(kn_emb, exer_emb, all_stu_emb)
    jax.block_until_ready((kn_o, ex_o, st_o))

    kn_r, ex_r, st_r = forward_ref(params, adj, kn_emb, exer_emb, all_stu_emb)
    # tolerance reflects the bf16 MXU path in the kernel vs the f32 reference
    assert jnp.allclose(kn_o, kn_r, atol=5e-2, rtol=5e-2)
    assert jnp.allclose(ex_o, ex_r, atol=5e-2, rtol=5e-2)
    assert jnp.allclose(st_o, st_r, atol=5e-2, rtol=5e-2)

    print("KERNEL_OK")
</pallas_src>

<mosaic_0001>
module attributes {stable_mosaic.version = 11 : i64} {
  func.func @_fusion_kernel(%arg0: i32, %arg1: memref<2xf32, #tpu.memory_space<smem>>, %arg2: memref<16x8xf32, #tpu.memory_space<vmem>>, %arg3: memref<16x8xf32, #tpu.memory_space<vmem>>, %arg4: memref<1x2x8x14xi8, #tpu.memory_space<vmem>>, %arg5: memref<1x2x8x10xi8, #tpu.memory_space<vmem>>, %arg6: memref<8x16xf32, #tpu.memory_space<vmem>>, %arg7: memref<8x16xf32, #tpu.memory_space<vmem>>, %arg8: memref<12x8xf32, #tpu.memory_space<vmem>>, %arg9: memref<4x8xf32, #tpu.memory_space<vmem>>, %arg10: memref<8x8xf32, #tpu.memory_space<vmem>>, %arg11: memref<8x8xf32, #tpu.memory_space<vmem>>, %arg12: memref<16x16xbf16, #tpu.memory_space<vmem>>, %arg13: memref<16x16xbf16, #tpu.memory_space<vmem>>) attributes {dimension_semantics = [#tpu.dimension_semantics<arbitrary>], iteration_bounds = array<i64: 2>, scalar_prefetch = 0 : i64, scratch_operands = 2 : i64, tpu.core_type = #tpu.core_type<tc>, window_params = [{transform_indices = @transform_0, window_bounds = array<i64: 2>}, {pipeline_mode = #tpu.pipeline_mode<synchronous>, transform_indices = @transform_1, window_bounds = array<i64: 16, 8>}, {pipeline_mode = #tpu.pipeline_mode<synchronous>, transform_indices = @transform_2, window_bounds = array<i64: 16, 8>}, {transform_indices = @transform_3, window_bounds = array<i64: 1, 2, 8, 14>}, {transform_indices = @transform_4, window_bounds = array<i64: 1, 2, 8, 10>}, {pipeline_mode = #tpu.pipeline_mode<synchronous>, transform_indices = @transform_5, window_bounds = array<i64: 8, 16>}, {pipeline_mode = #tpu.pipeline_mode<synchronous>, transform_indices = @transform_6, window_bounds = array<i64: 8, 16>}, {pipeline_mode = #tpu.pipeline_mode<synchronous>, transform_indices = @transform_7, window_bounds = array<i64: 12, 8>}, {pipeline_mode = #tpu.pipeline_mode<synchronous>, transform_indices = @transform_8, window_bounds = array<i64: 4, 8>}, {transform_indices = @transform_9, window_bounds = array<i64: 8, 8>}, {transform_indices = @transform_10, window_bounds = array<i64: 8, 8>}]} {
    %c8_i32 = arith.constant 8 : i32
    %0 = arith.muli %arg0, %c8_i32 : i32
    %1 = tpu.assume_multiple %0, 8 : i32
    %c0_i32 = arith.constant 0 : i32
    %2 = arith.cmpi eq, %arg0, %c0_i32 : i32
    %3 = arith.extui %2 : i1 to i32
    %c0_i32_0 = arith.constant 0 : i32
    %4 = arith.cmpi ne, %3, %c0_i32_0 : i32
    scf.if %4 {
      %c0_70 = arith.constant 0 : index
      %c0_71 = arith.constant 0 : index
      %231 = vector.load %arg2[%c0_70, %c0_71] : memref<16x8xf32, #tpu.memory_space<vmem>>, vector<16x8xf32>
      %232 = arith.truncf %231 : vector<16x8xf32> to vector<16x8xbf16>
      %c0_72 = arith.constant 0 : index
      %c0_73 = arith.constant 0 : index
      %233 = vector.load %arg6[%c0_72, %c0_73] : memref<8x16xf32, #tpu.memory_space<vmem>>, vector<8x16xf32>
      %234 = arith.truncf %233 : vector<8x16xf32> to vector<8x16xbf16>
      %cst_74 = arith.constant dense<0.000000e+00> : vector<16x16xf32>
      %235 = tpu.matmul %232, %234, %cst_74 {dimension_numbers = #tpu.dot_dimension_numbers<[1], [0], [0], [1], [0, 0, 1, 1], [], []>} : vector<16x8xbf16>, vector<8x16xbf16>, vector<16x16xf32> -> vector<16x16xf32>
      %236 = arith.truncf %235 : vector<16x16xf32> to vector<16x16xbf16>
      %c0_75 = arith.constant 0 : index
      %c0_76 = arith.constant 0 : index
      %237 = vector.load %arg12[%c0_75, %c0_76] : memref<16x16xbf16, #tpu.memory_space<vmem>>, vector<16x16xbf16>
      tpu.vector_store %arg12[%c0_75, %c0_76], %236 {strides = array<i32>} : memref<16x16xbf16, #tpu.memory_space<vmem>>, vector<16x16xbf16>,
      %c0_77 = arith.constant 0 : index
      %c0_78 = arith.constant 0 : index
      %238 = vector.load %arg3[%c0_77, %c0_78] : memref<16x8xf32, #tpu.memory_space<vmem>>, vector<16x8xf32>
      %239 = arith.truncf %238 : vector<16x8xf32> to vector<16x8xbf16>
      %c0_79 = arith.constant 0 : index
      %c0_80 = arith.constant 0 : index
      %240 = vector.load %arg7[%c0_79, %c0_80] : memref<8x16xf32, #tpu.memory_space<vmem>>, vector<8x16xf32>
      %241 = arith.truncf %240 : vector<8x16xf32> to vector<8x16xbf16>
      %cst_81 = arith.constant dense<0.000000e+00> : vector<16x16xf32>
      %242 = tpu.matmul %239, %241, %cst_81 {dimension_numbers = #tpu.dot_dimension_numbers<[1], [0], [0], [1], [0, 0, 1, 1], [], []>} : vector<16x8xbf16>, vector<8x16xbf16>, vector<16x16xf32> -> vector<16x16xf32>
      %243 = arith.truncf %242 : vector<16x16xf32> to vector<16x16xbf16>
      %c0_82 = arith.constant 0 : index
      %c0_83 = arith.constant 0 : index
      %244 = vector.load %arg13[%c0_82, %c0_83] : memref<16x16xbf16, #tpu.memory_space<vmem>>, vector<16x16xbf16>
      tpu.vector_store %arg13[%c0_82, %c0_83], %243 {strides = array<i32>} : memref<16x16xbf16, #tpu.memory_space<vmem>>, vector<16x16xbf16>,
    } else {
    }
    %c0 = arith.constant 0 : index
    %c0_1 = arith.constant 0 : index
    %5 = vector.load %arg8[%c0, %c0_1] : memref<12x8xf32, #tpu.memory_space<vmem>>, vector<12x8xf32>
    %6 = arith.index_cast %1 : i32 to index
    %c0_2 = arith.constant 0 : index
    %7 = vector.load %arg12[%6, %c0_2] : memref<16x16xbf16, #tpu.memory_space<vmem>>, vector<8x16xbf16>
    %8 = arith.index_cast %1 : i32 to index
    %c0_3 = arith.constant 0 : index
    %9 = vector.load %arg13[%8, %c0_3] : memref<16x16xbf16, #tpu.memory_space<vmem>>, vector<8x16xbf16>
    %c0_4 = arith.constant 0 : index
    %c0_5 = arith.constant 0 : index
    %10 = vector.load %arg12[%c0_4, %c0_5] : memref<16x16xbf16, #tpu.memory_space<vmem>>, vector<14x16xbf16>
    %c0_6 = arith.constant 0 : index
    %c0_7 = arith.constant 0 : index
    %11 = vector.load %arg13[%c0_6, %c0_7] : memref<16x16xbf16, #tpu.memory_space<vmem>>, vector<10x16xbf16>
    %12 = vector.extract_strided_slice %7 {offsets = [0, 0], sizes = [8, 8], strides = [1, 1]} : vector<8x16xbf16> to vector<8x8xbf16>
    %13 = vector.extract_strided_slice %10 {offsets = [0, 0], sizes = [14, 8], strides = [1, 1]} : vector<14x16xbf16> to vector<14x8xbf16>
    %c0_8 = arith.constant 0 : index
    %c0_9 = arith.constant 0 : index
    %c0_10 = arith.constant 0 : index
    %c0_11 = arith.constant 0 : index
    %14 = vector.load %arg4[%c0_8, %c0_9, %c0_10, %c0_11] : memref<1x2x8x14xi8, #tpu.memory_space<vmem>>, vector<1x1x8x14xi8>
    %15 = vector.shape_cast %14 : vector<1x1x8x14xi8> to vector<8x14xi8>
    %16 = vector.extract_strided_slice %5 {offsets = [0, 0], sizes = [1, 8], strides = [1, 1]} : vector<12x8xf32> to vector<1x8xf32>
    %17 = vector.extract_strided_slice %5 {offsets = [1, 0], sizes = [1, 8], strides = [1, 1]} : vector<12x8xf32> to vector<1x8xf32>
    %18 = vector.extract_strided_slice %5 {offsets = [2, 0], sizes = [1, 8], strides = [1, 1]} : vector<12x8xf32> to vector<1x8xf32>
    %19 = arith.extf %12 : vector<8x8xbf16> to vector<8x8xf32>
    %20 = vector.broadcast %17 : vector<1x8xf32> to vector<8x8xf32>
    %21 = arith.mulf %19, %20 : vector<8x8xf32>
    %cst = arith.constant dense<0.000000e+00> : vector<8xf32>
    %22 = vector.multi_reduction <add>, %21, %cst [1] : vector<8x8xf32> to vector<8xf32>
    %23 = vector.shape_cast %22 : vector<8xf32> to vector<8x1xf32>
    %24 = arith.truncf %16 : vector<1x8xf32> to vector<1x8xbf16>
    %cst_12 = arith.constant dense<0.000000e+00> : vector<1x14xf32>
    %25 = tpu.matmul %24, %13, %cst_12 {dimension_numbers = #tpu.dot_dimension_numbers<[1], [1], [0], [0], [0, 0, 1, 0], [], []>} : vector<1x8xbf16>, vector<14x8xbf16>, vector<1x14xf32> -> vector<1x14xf32>
    %26 = vector.broadcast %23 : vector<8x1xf32> to vector<8x14xf32>
    %27 = vector.broadcast %25 : vector<1x14xf32> to vector<8x14xf32>
    %28 = arith.addf %26, %27 : vector<8x14xf32>
    %cst_13 = arith.constant 0.000000e+00 : f32
    %29 = vector.broadcast %cst_13 : f32 to vector<8x14xf32>
    %30 = arith.cmpf ogt, %28, %29 : vector<8x14xf32>
    %cst_14 = arith.constant 2.000000e-01 : f32
    %31 = vector.broadcast %cst_14 : f32 to vector<8x14xf32>
    %32 = arith.mulf %31, %28 : vector<8x14xf32>
    %33 = arith.select %30, %28, %32 : vector<8x14xi1>, vector<8x14xf32>
    %34 = arith.sitofp %15 : vector<8x14xi8> to vector<8x14xf32>
    %cst_15 = arith.constant 0.000000e+00 : f32
    %35 = vector.broadcast %cst_15 : f32 to vector<8x14xf32>
    %36 = arith.cmpf ogt, %34, %35 : vector<8x14xf32>
    %cst_16 = arith.constant -1.000000e+30 : f32
    %37 = vector.broadcast %cst_16 : f32 to vector<8x14xf32>
    %38 = arith.select %36, %33, %37 : vector<8x14xi1>, vector<8x14xf32>
    %cst_17 = arith.constant dense<0xFF800000> : vector<8xf32>
    %39 = vector.multi_reduction <maximumf>, %38, %cst_17 [1] : vector<8x14xf32> to vector<8xf32>
    %40 = vector.shape_cast %39 : vector<8xf32> to vector<8x1xf32>
    %41 = vector.broadcast %40 : vector<8x1xf32> to vector<8x14xf32>
    %42 = arith.subf %38, %41 : vector<8x14xf32>
    %43 = math.exp %42 : vector<8x14xf32>
    %cst_18 = arith.constant dense<0.000000e+00> : vector<8xf32>
    %44 = vector.multi_reduction <add>, %43, %cst_18 [1] : vector<8x14xf32> to vector<8xf32>
    %45 = vector.shape_cast %44 : vector<8xf32> to vector<8x1xf32>
    %46 = tpu.reciprocal %45 {approx = true} : vector<8x1xf32> -> vector<8x1xf32>
    %47 = vector.broadcast %46 : vector<8x1xf32> to vector<8x14xf32>
    %48 = arith.mulf %43, %47 : vector<8x14xf32>
    %49 = arith.truncf %48 : vector<8x14xf32> to vector<8x14xbf16>
    %cst_19 = arith.constant dense<0.000000e+00> : vector<8x8xf32>
    %50 = tpu.matmul %49, %13, %cst_19 {dimension_numbers = #tpu.dot_dimension_numbers<[1], [0], [0], [1], [0, 0, 1, 1], [], []>} : vector<8x14xbf16>, vector<14x8xbf16>, vector<8x8xf32> -> vector<8x8xf32>
    %51 = vector.broadcast %18 : vector<1x8xf32> to vector<8x8xf32>
    %52 = arith.addf %50, %51 : vector<8x8xf32>
    %53 = vector.extract_strided_slice %7 {offsets = [0, 8], sizes = [8, 8], strides = [1, 1]} : vector<8x16xbf16> to vector<8x8xbf16>
    %54 = vector.extract_strided_slice %10 {offsets = [0, 8], sizes = [14, 8], strides = [1, 1]} : vector<14x16xbf16> to vector<14x8xbf16>
    %c0_20 = arith.constant 0 : index
    %c1 = arith.constant 1 : index
    %c0_21 = arith.constant 0 : index
    %c0_22 = arith.constant 0 : index
    %55 = vector.load %arg4[%c0_20, %c1, %c0_21, %c0_22] : memref<1x2x8x14xi8, #tpu.memory_space<vmem>>, vector<1x1x8x14xi8>
    %56 = vector.shape_cast %55 : vector<1x1x8x14xi8> to vector<8x14xi8>
    %57 = vector.extract_strided_slice %5 {offsets = [3, 0], sizes = [1, 8], strides = [1, 1]} : vector<12x8xf32> to vector<1x8xf32>
    %58 = vector.extract_strided_slice %5 {offsets = [4, 0], sizes = [1, 8], strides = [1, 1]} : vector<12x8xf32> to vector<1x8xf32>
    %59 = vector.extract_strided_slice %5 {offsets = [5, 0], sizes = [1, 8], strides = [1, 1]} : vector<12x8xf32> to vector<1x8xf32>
    %60 = arith.extf %53 : vector<8x8xbf16> to vector<8x8xf32>
    %61 = vector.broadcast %58 : vector<1x8xf32> to vector<8x8xf32>
    %62 = arith.mulf %60, %61 : vector<8x8xf32>
    %cst_23 = arith.constant dense<0.000000e+00> : vector<8xf32>
    %63 = vector.multi_reduction <add>, %62, %cst_23 [1] : vector<8x8xf32> to vector<8xf32>
    %64 = vector.shape_cast %63 : vector<8xf32> to vector<8x1xf32>
    %65 = arith.truncf %57 : vector<1x8xf32> to vector<1x8xbf16>
    %cst_24 = arith.constant dense<0.000000e+00> : vector<1x14xf32>
    %66 = tpu.matmul %65, %54, %cst_24 {dimension_numbers = #tpu.dot_dimension_numbers<[1], [1], [0], [0], [0, 0, 1, 0], [], []>} : vector<1x8xbf16>, vector<14x8xbf16>, vector<1x14xf32> -> vector<1x14xf32>
    %67 = vector.broadcast %64 : vector<8x1xf32> to vector<8x14xf32>
    %68 = vector.broadcast %66 : vector<1x14xf32> to vector<8x14xf32>
    %69 = arith.addf %67, %68 : vector<8x14xf32>
    %cst_25 = arith.constant 0.000000e+00 : f32
    %70 = vector.broadcast %cst_25 : f32 to vector<8x14xf32>
    %71 = arith.cmpf ogt, %69, %70 : vector<8x14xf32>
    %cst_26 = arith.constant 2.000000e-01 : f32
    %72 = vector.broadcast %cst_26 : f32 to vector<8x14xf32>
    %73 = arith.mulf %72, %69 : vector<8x14xf32>
    %74 = arith.select %71, %69, %73 : vector<8x14xi1>, vector<8x14xf32>
    %75 = arith.sitofp %56 : vector<8x14xi8> to vector<8x14xf32>
    %cst_27 = arith.constant 0.000000e+00 : f32
    %76 = vector.broadcast %cst_27 : f32 to vector<8x14xf32>
    %77 = arith.cmpf ogt, %75, %76 : vector<8x14xf32>
    %cst_28 = arith.constant -1.000000e+30 : f32
    %78 = vector.broadcast %cst_28 : f32 to vector<8x14xf32>
    %79 = arith.select %77, %74, %78 : vector<8x14xi1>, vector<8x14xf32>
    %cst_29 = arith.constant dense<0xFF800000> : vector<8xf32>
    %80 = vector.multi_reduction <maximumf>, %79, %cst_29 [1] : vector<8x14xf32> to vector<8xf32>
    %81 = vector.shape_cast %80 : vector<8xf32> to vector<8x1xf32>
    %82 = vector.broadcast %81 : vector<8x1xf32> to vector<8x14xf32>
    %83 = arith.subf %79, %82 : vector<8x14xf32>
    %84 = math.exp %83 : vector<8x14xf32>
    %cst_30 = arith.constant dense<0.000000e+00> : vector<8xf32>
    %85 = vector.multi_reduction <add>, %84, %cst_30 [1] : vector<8x14xf32> to vector<8xf32>
    %86 = vector.shape_cast %85 : vector<8xf32> to vector<8x1xf32>
    %87 = tpu.reciprocal %86 {approx = true} : vector<8x1xf32> -> vector<8x1xf32>
    %88 = vector.broadcast %87 : vector<8x1xf32> to vector<8x14xf32>
    %89 = arith.mulf %84, %88 : vector<8x14xf32>
    %90 = arith.truncf %89 : vector<8x14xf32> to vector<8x14xbf16>
    %cst_31 = arith.constant dense<0.000000e+00> : vector<8x8xf32>
    %91 = tpu.matmul %90, %54, %cst_31 {dimension_numbers = #tpu.dot_dimension_numbers<[1], [0], [0], [1], [0, 0, 1, 1], [], []>} : vector<8x14xbf16>, vector<14x8xbf16>, vector<8x8xf32> -> vector<8x8xf32>
    %92 = vector.broadcast %59 : vector<1x8xf32> to vector<8x8xf32>
    %93 = arith.addf %91, %92 : vector<8x8xf32>
    %94 = vector.extract_strided_slice %9 {offsets = [0, 0], sizes = [8, 8], strides = [1, 1]} : vector<8x16xbf16> to vector<8x8xbf16>
    %95 = vector.extract_strided_slice %11 {offsets = [0, 0], sizes = [10, 8], strides = [1, 1]} : vector<10x16xbf16> to vector<10x8xbf16>
    %c0_32 = arith.constant 0 : index
    %c0_33 = arith.constant 0 : index
    %c0_34 = arith.constant 0 : index
    %c0_35 = arith.constant 0 : index
    %96 = vector.load %arg5[%c0_32, %c0_33, %c0_34, %c0_35] : memref<1x2x8x10xi8, #tpu.memory_space<vmem>>, vector<1x1x8x10xi8>
    %97 = vector.shape_cast %96 : vector<1x1x8x10xi8> to vector<8x10xi8>
    %98 = vector.extract_strided_slice %5 {offsets = [6, 0], sizes = [1, 8], strides = [1, 1]} : vector<12x8xf32> to vector<1x8xf32>
    %99 = vector.extract_strided_slice %5 {offsets = [7, 0], sizes = [1, 8], strides = [1, 1]} : vector<12x8xf32> to vector<1x8xf32>
    %100 = vector.extract_strided_slice %5 {offsets = [8, 0], sizes = [1, 8], strides = [1, 1]} : vector<12x8xf32> to vector<1x8xf32>
    %101 = arith.extf %94 : vector<8x8xbf16> to vector<8x8xf32>
    %102 = vector.broadcast %99 : vector<1x8xf32> to vector<8x8xf32>
    %103 = arith.mulf %101, %102 : vector<8x8xf32>
    %cst_36 = arith.constant dense<0.000000e+00> : vector<8xf32>
    %104 = vector.multi_reduction <add>, %103, %cst_36 [1] : vector<8x8xf32> to vector<8xf32>
    %105 = vector.shape_cast %104 : vector<8xf32> to vector<8x1xf32>
    %106 = arith.truncf %98 : vector<1x8xf32> to vector<1x8xbf16>
    %cst_37 = arith.constant dense<0.000000e+00> : vector<1x10xf32>
    %107 = tpu.matmul %106, %95, %cst_37 {dimension_numbers = #tpu.dot_dimension_numbers<[1], [1], [0], [0], [0, 0, 1, 0], [], []>} : vector<1x8xbf16>, vector<10x8xbf16>, vector<1x10xf32> -> vector<1x10xf32>
    %108 = vector.broadcast %105 : vector<8x1xf32> to vector<8x10xf32>
    %109 = vector.broadcast %107 : vector<1x10xf32> to vector<8x10xf32>
    %110 = arith.addf %108, %109 : vector<8x10xf32>
    %cst_38 = arith.constant 0.000000e+00 : f32
    %111 = vector.broadcast %cst_38 : f32 to vector<8x10xf32>
    %112 = arith.cmpf ogt, %110, %111 : vector<8x10xf32>
    %cst_39 = arith.constant 2.000000e-01 : f32
    %113 = vector.broadcast %cst_39 : f32 to vector<8x10xf32>
    %114 = arith.mulf %113, %110 : vector<8x10xf32>
    %115 = arith.select %112, %110, %114 : vector<8x10xi1>, vector<8x10xf32>
    %116 = arith.sitofp %97 : vector<8x10xi8> to vector<8x10xf32>
    %cst_40 = arith.constant 0.000000e+00 : f32
    %117 = vector.broadcast %cst_40 : f32 to vector<8x10xf32>
    %118 = arith.cmpf ogt, %116, %117 : vector<8x10xf32>
    %cst_41 = arith.constant -1.000000e+30 : f32
    %119 = vector.broadcast %cst_41 : f32 to vector<8x10xf32>
    %120 = arith.select %118, %115, %119 : vector<8x10xi1>, vector<8x10xf32>
    %cst_42 = arith.constant dense<0xFF800000> : vector<8xf32>
    %121 = vector.multi_reduction <maximumf>, %120, %cst_42 [1] : vector<8x10xf32> to vector<8xf32>
    %122 = vector.shape_cast %121 : vector<8xf32> to vector<8x1xf32>
    %123 = vector.broadcast %122 : vector<8x1xf32> to vector<8x10xf32>
    %124 = arith.subf %120, %123 : vector<8x10xf32>
    %125 = math.exp %124 : vector<8x10xf32>
    %cst_43 = arith.constant dense<0.000000e+00> : vector<8xf32>
    %126 = vector.multi_reduction <add>, %125, %cst_43 [1] : vector<8x10xf32> to vector<8xf32>
    %127 = vector.shape_cast %126 : vector<8xf32> to vector<8x1xf32>
    %128 = tpu.reciprocal %127 {approx = true} : vector<8x1xf32> -> vector<8x1xf32>
    %129 = vector.broadcast %128 : vector<8x1xf32> to vector<8x10xf32>
    %130 = arith.mulf %125, %129 : vector<8x10xf32>
    %131 = arith.truncf %130 : vector<8x10xf32> to vector<8x10xbf16>
    %cst_44 = arith.constant dense<0.000000e+00> : vector<8x8xf32>
    %132 = tpu.matmul %131, %95, %cst_44 {dimension_numbers = #tpu.dot_dimension_numbers<[1], [0], [0], [1], [0, 0, 1, 1], [], []>} : vector<8x10xbf16>, vector<10x8xbf16>, vector<8x8xf32> -> vector<8x8xf32>
    %133 = vector.broadcast %100 : vector<1x8xf32> to vector<8x8xf32>
    %134 = arith.addf %132, %133 : vector<8x8xf32>
    %135 = vector.extract_strided_slice %9 {offsets = [0, 8], sizes = [8, 8], strides = [1, 1]} : vector<8x16xbf16> to vector<8x8xbf16>
    %136 = vector.extract_strided_slice %11 {offsets = [0, 8], sizes = [10, 8], strides = [1, 1]} : vector<10x16xbf16> to vector<10x8xbf16>
    %c0_45 = arith.constant 0 : index
    %c1_46 = arith.constant 1 : index
    %c0_47 = arith.constant 0 : index
    %c0_48 = arith.constant 0 : index
    %137 = vector.load %arg5[%c0_45, %c1_46, %c0_47, %c0_48] : memref<1x2x8x10xi8, #tpu.memory_space<vmem>>, vector<1x1x8x10xi8>
    %138 = vector.shape_cast %137 : vector<1x1x8x10xi8> to vector<8x10xi8>
    %139 = vector.extract_strided_slice %5 {offsets = [9, 0], sizes = [1, 8], strides = [1, 1]} : vector<12x8xf32> to vector<1x8xf32>
    %140 = vector.extract_strided_slice %5 {offsets = [10, 0], sizes = [1, 8], strides = [1, 1]} : vector<12x8xf32> to vector<1x8xf32>
    %141 = vector.extract_strided_slice %5 {offsets = [11, 0], sizes = [1, 8], strides = [1, 1]} : vector<12x8xf32> to vector<1x8xf32>
    %142 = arith.extf %135 : vector<8x8xbf16> to vector<8x8xf32>
    %143 = vector.broadcast %140 : vector<1x8xf32> to vector<8x8xf32>
    %144 = arith.mulf %142, %143 : vector<8x8xf32>
    %cst_49 = arith.constant dense<0.000000e+00> : vector<8xf32>
    %145 = vector.multi_reduction <add>, %144, %cst_49 [1] : vector<8x8xf32> to vector<8xf32>
    %146 = vector.shape_cast %145 : vector<8xf32> to vector<8x1xf32>
    %147 = arith.truncf %139 : vector<1x8xf32> to vector<1x8xbf16>
    %cst_50 = arith.constant dense<0.000000e+00> : vector<1x10xf32>
    %148 = tpu.matmul %147, %136, %cst_50 {dimension_numbers = #tpu.dot_dimension_numbers<[1], [1], [0], [0], [0, 0, 1, 0], [], []>} : vector<1x8xbf16>, vector<10x8xbf16>, vector<1x10xf32> -> vector<1x10xf32>
    %149 = vector.broadcast %146 : vector<8x1xf32> to vector<8x10xf32>
    %150 = vector.broadcast %148 : vector<1x10xf32> to vector<8x10xf32>
    %151 = arith.addf %149, %150 : vector<8x10xf32>
    %cst_51 = arith.constant 0.000000e+00 : f32
    %152 = vector.broadcast %cst_51 : f32 to vector<8x10xf32>
    %153 = arith.cmpf ogt, %151, %152 : vector<8x10xf32>
    %cst_52 = arith.constant 2.000000e-01 : f32
    %154 = vector.broadcast %cst_52 : f32 to vector<8x10xf32>
    %155 = arith.mulf %154, %151 : vector<8x10xf32>
    %156 = arith.select %153, %151, %155 : vector<8x10xi1>, vector<8x10xf32>
    %157 = arith.sitofp %138 : vector<8x10xi8> to vector<8x10xf32>
    %cst_53 = arith.constant 0.000000e+00 : f32
    %158 = vector.broadcast %cst_53 : f32 to vector<8x10xf32>
    %159 = arith.cmpf ogt, %157, %158 : vector<8x10xf32>
    %cst_54 = arith.constant -1.000000e+30 : f32
    %160 = vector.broadcast %cst_54 : f32 to vector<8x10xf32>
    %161 = arith.select %159, %156, %160 : vector<8x10xi1>, vector<8x10xf32>
    %cst_55 = arith.constant dense<0xFF800000> : vector<8xf32>
    %162 = vector.multi_reduction <maximumf>, %161, %cst_55 [1] : vector<8x10xf32> to vector<8xf32>
    %163 = vector.shape_cast %162 : vector<8xf32> to vector<8x1xf32>
    %164 = vector.broadcast %163 : vector<8x1xf32> to vector<8x10xf32>
    %165 = arith.subf %161, %164 : vector<8x10xf32>
    %166 = math.exp %165 : vector<8x10xf32>
    %cst_56 = arith.constant dense<0.000000e+00> : vector<8xf32>
    %167 = vector.multi_reduction <add>, %166, %cst_56 [1] : vector<8x10xf32> to vector<8xf32>
    %168 = vector.shape_cast %167 : vector<8xf32> to vector<8x1xf32>
    %169 = tpu.reciprocal %168 {approx = true} : vector<8x1xf32> -> vector<8x1xf32>
    %170 = vector.broadcast %169 : vector<8x1xf32> to vector<8x10xf32>
    %171 = arith.mulf %166, %170 : vector<8x10xf32>
    %172 = arith.truncf %171 : vector<8x10xf32> to vector<8x10xbf16>
    %cst_57 = arith.constant dense<0.000000e+00> : vector<8x8xf32>
    %173 = tpu.matmul %172, %136, %cst_57 {dimension_numbers = #tpu.dot_dimension_numbers<[1], [0], [0], [1], [0, 0, 1, 1], [], []>} : vector<8x10xbf16>, vector<10x8xbf16>, vector<8x8xf32> -> vector<8x8xf32>
    %174 = vector.broadcast %141 : vector<1x8xf32> to vector<8x8xf32>
    %175 = arith.addf %173, %174 : vector<8x8xf32>
    %176 = arith.index_cast %1 : i32 to index
    %c0_58 = arith.constant 0 : index
    %177 = vector.load %arg2[%176, %c0_58] : memref<16x8xf32, #tpu.memory_space<vmem>>, vector<8x8xf32>
    %178 = arith.index_cast %1 : i32 to index
    %c0_59 = arith.constant 0 : index
    %179 = vector.load %arg3[%178, %c0_59] : memref<16x8xf32, #tpu.memory_space<vmem>>, vector<8x8xf32>
    %c0_60 = arith.constant 0 : index
    %c0_61 = arith.constant 0 : index
    %180 = vector.load %arg9[%c0_60, %c0_61] : memref<4x8xf32, #tpu.memory_space<vmem>>, vector<4x8xf32>
    %181 = vector.extract_strided_slice %180 {offsets = [0, 0], sizes = [1, 8], strides = [1, 1]} : vector<4x8xf32> to vector<1x8xf32>
    %182 = vector.extract_strided_slice %180 {offsets = [1, 0], sizes = [1, 8], strides = [1, 1]} : vector<4x8xf32> to vector<1x8xf32>
    %183 = vector.extract_strided_slice %180 {offsets = [2, 0], sizes = [1, 8], strides = [1, 1]} : vector<4x8xf32> to vector<1x8xf32>
    %184 = vector.extract_strided_slice %180 {offsets = [3, 0], sizes = [1, 8], strides = [1, 1]} : vector<4x8xf32> to vector<1x8xf32>
    %c0_62 = arith.constant 0 : index
    %185 = memref.load %arg1[%c0_62] : memref<2xf32, #tpu.memory_space<smem>>
    %c1_63 = arith.constant 1 : index
    %186 = memref.load %arg1[%c1_63] : memref<2xf32, #tpu.memory_space<smem>>
    %187 = vector.broadcast %181 : vector<1x8xf32> to vector<8x8xf32>
    %188 = arith.mulf %177, %187 : vector<8x8xf32>
    %189 = vector.broadcast %182 : vector<1x8xf32> to vector<8x8xf32>
    %190 = arith.mulf %93, %189 : vector<8x8xf32>
    %191 = arith.addf %188, %190 : vector<8x8xf32>
    %cst_64 = arith.constant dense<0.000000e+00> : vector<8xf32>
    %192 = vector.multi_reduction <add>, %191, %cst_64 [1] : vector<8x8xf32> to vector<8xf32>
    %193 = vector.shape_cast %192 : vector<8xf32> to vector<8x1xf32>
    %194 = vector.broadcast %185 : f32 to vector<8x1xf32>
    %195 = arith.addf %193, %194 : vector<8x1xf32>
    %196 = vector.broadcast %183 : vector<1x8xf32> to vector<8x8xf32>
    %197 = arith.mulf %177, %196 : vector<8x8xf32>
    %198 = vector.broadcast %184 : vector<1x8xf32> to vector<8x8xf32>
    %199 = arith.mulf %175, %198 : vector<8x8xf32>
    %200 = arith.addf %197, %199 : vector<8x8xf32>
    %cst_65 = arith.constant dense<0.000000e+00> : vector<8xf32>
    %201 = vector.multi_reduction <add>, %200, %cst_65 [1] : vector<8x8xf32> to vector<8xf32>
    %202 = vector.shape_cast %201 : vector<8xf32> to vector<8x1xf32>
    %203 = vector.broadcast %186 : f32 to vector<8x1xf32>
    %204 = arith.addf %202, %203 : vector<8x1xf32>
    %205 = arith.maximumf %195, %204 : vector<8x1xf32>
    %206 = arith.subf %195, %205 : vector<8x1xf32>
    %207 = math.exp %206 : vector<8x1xf32>
    %208 = arith.subf %204, %205 : vector<8x1xf32>
    %209 = math.exp %208 : vector<8x1xf32>
    %210 = arith.addf %207, %209 : vector<8x1xf32>
    %211 = tpu.reciprocal %210 {approx = true} : vector<8x1xf32> -> vector<8x1xf32>
    %212 = arith.mulf %207, %211 : vector<8x1xf32>
    %213 = vector.broadcast %212 : vector<8x1xf32> to vector<8x8xf32>
    %214 = arith.mulf %213, %93 : vector<8x8xf32>
    %215 = arith.mulf %209, %211 : vector<8x1xf32>
    %216 = vector.broadcast %215 : vector<8x1xf32> to vector<8x8xf32>
    %217 = arith.mulf %216, %175 : vector<8x8xf32>
    %218 = arith.addf %214, %217 : vector<8x8xf32>
    %219 = tpu.iota {dimensions = array<i32: 0>} : vector<8x1xi32>
    %220 = vector.broadcast %1 : i32 to vector<8x1xi32>
    %221 = arith.addi %220, %219 : vector<8x1xi32>
    %c6_i32 = arith.constant 6 : i32
    %222 = vector.broadcast %c6_i32 : i32 to vector<8x1xi32>
    %223 = arith.cmpi slt, %221, %222 : vector<8x1xi32>
    %224 = vector.shape_cast %223 : vector<8x1xi1> to vector<8x1xi1>
    %225 = vector.broadcast %224 : vector<8x1xi1> to vector<8x8xi1>
    %226 = arith.select %225, %218, %52 : vector<8x8xi1>, vector<8x8xf32>
    %227 = arith.addf %177, %226 : vector<8x8xf32>
    %c0_66 = arith.constant 0 : index
    %c0_67 = arith.constant 0 : index
    %228 = vector.load %arg10[%c0_66, %c0_67] : memref<8x8xf32, #tpu.memory_space<vmem>>, vector<8x8xf32>
    tpu.vector_store %arg10[%c0_66, %c0_67], %227 {strides = array<i32>} : memref<8x8xf32, #tpu.memory_space<vmem>>, vector<8x8xf32>,
    %229 = arith.addf %179, %134 : vector<8x8xf32>
    %c0_68 = arith.constant 0 : index
    %c0_69 = arith.constant 0 : index
    %230 = vector.load %arg11[%c0_68, %c0_69] : memref<8x8xf32, #tpu.memory_space<vmem>>, vector<8x8xf32>
    tpu.vector_store %arg11[%c0_68, %c0_69], %229 {strides = array<i32>} : memref<8x8xf32, #tpu.memory_space<vmem>>, vector<8x8xf32>,
    return
  }
  func.func @transform_0(%arg0: i32) -> i32 {
    %c0_i32 = arith.constant 0 : i32
    %c0_i32_0 = arith.constant 0 : i32
    return %c0_i32 : i32
  }
  func.func @transform_1(%arg0: i32) -> (i32, i32) {
    %c0_i32 = arith.constant 0 : i32
    %c0_i32_0 = arith.constant 0 : i32
    %c0_i32_1 = arith.constant 0 : i32
    return %c0_i32, %c0_i32_0 : i32, i32
  }
  func.func @transform_2(%arg0: i32) -> (i32, i32) {
    %c0_i32 = arith.constant 0 : i32
    %c0_i32_0 = arith.constant 0 : i32
    %c0_i32_1 = arith.constant 0 : i32
    return %c0_i32, %c0_i32_0 : i32, i32
  }
  func.func @transform_3(%arg0: i32) -> (i32, i32, i32, i32) {
    %c0_i32 = arith.constant 0 : i32
    %c0_i32_0 = arith.constant 0 : i32
    %c0_i32_1 = arith.constant 0 : i32
    %c0_i32_2 = arith.constant 0 : i32
    return %arg0, %c0_i32, %c0_i32_0, %c0_i32_1 : i32, i32, i32, i32
  }
  func.func @transform_4(%arg0: i32) -> (i32, i32, i32, i32) {
    %c0_i32 = arith.constant 0 : i32
    %c0_i32_0 = arith.constant 0 : i32
    %c0_i32_1 = arith.constant 0 : i32
    %c0_i32_2 = arith.constant 0 : i32
    return %arg0, %c0_i32, %c0_i32_0, %c0_i32_1 : i32, i32, i32, i32
  }
  func.func @transform_5(%arg0: i32) -> (i32, i32) {
    %c0_i32 = arith.constant 0 : i32
    %c0_i32_0 = arith.constant 0 : i32
    %c0_i32_1 = arith.constant 0 : i32
    return %c0_i32, %c0_i32_0 : i32, i32
  }
  func.func @transform_6(%arg0: i32) -> (i32, i32) {
    %c0_i32 = arith.constant 0 : i32
    %c0_i32_0 = arith.constant 0 : i32
    %c0_i32_1 = arith.constant 0 : i32
    return %c0_i32, %c0_i32_0 : i32, i32
  }
  func.func @transform_7(%arg0: i32) -> (i32, i32) {
    %c0_i32 = arith.constant 0 : i32
    %c0_i32_0 = arith.constant 0 : i32
    %c0_i32_1 = arith.constant 0 : i32
    return %c0_i32, %c0_i32_0 : i32, i32
  }
  func.func @transform_8(%arg0: i32) -> (i32, i32) {
    %c0_i32 = arith.constant 0 : i32
    %c0_i32_0 = arith.constant 0 : i32
    %c0_i32_1 = arith.constant 0 : i32
    return %c0_i32, %c0_i32_0 : i32, i32
  }
  func.func @transform_9(%arg0: i32) -> (i32, i32) {
    %c0_i32 = arith.constant 0 : i32
    %c0_i32_0 = arith.constant 0 : i32
    return %arg0, %c0_i32 : i32, i32
  }
  func.func @transform_10(%arg0: i32) -> (i32, i32) {
    %c0_i32 = arith.constant 0 : i32
    %c0_i32_0 = arith.constant 0 : i32
    return %arg0, %c0_i32 : i32, i32
  }
}

</mosaic_0001>

<llo_original>
// kernel: tpu_custom_call.1
$region0: #{tpu_custom_call.1}
  #allocation0 [shape = 'u32[]', space=smem, size = 0x4, offset = 0x4, fixed_abs, tag = 'smem constant byte address 0x4 - core index']
  #allocation1 [shape = 'u32[144,128]{1,0:T(1,128)}', space=vmem, size = 0x12000, scoped, tag = 'internal scratch']
  #allocation2 [shape = 'bf16[16,16]{1,0:T(8,128)(2,1)}', space=vmem, size = 0x1000, scoped, tag = 'scratch operand']
  #allocation3 [shape = 'bf16[16,16]{1,0:T(8,128)(2,1)}', space=vmem, size = 0x1000, scoped, tag = 'scratch operand']
  %s0 = inlined_call_operand.vmem [shape: f32[2], index: 0, kind: input, shape index: {}]
  %s1 = inlined_call_operand.vmem [shape: f32[16,8], index: 1, kind: input, shape index: {}]
  %s2 = inlined_call_operand.vmem [shape: f32[16,8], index: 2, kind: input, shape index: {}]
  %s3 = inlined_call_operand.vmem [shape: s8[2,2,8,14], index: 3, kind: input, shape index: {}]
  %s4 = inlined_call_operand.vmem [shape: s8[2,2,8,10], index: 4, kind: input, shape index: {}]
  %s5 = inlined_call_operand.vmem [shape: f32[8,16], index: 5, kind: input, shape index: {}]
  %s6 = inlined_call_operand.vmem [shape: f32[8,16], index: 6, kind: input, shape index: {}]
  %s7 = inlined_call_operand.vmem [shape: f32[12,8], index: 7, kind: input, shape index: {}]
  %s8 = inlined_call_operand.vmem [shape: f32[4,8], index: 8, kind: input, shape index: {}]
  %s9 = inlined_call_operand.vmem [shape: f32[16,8], index: 9, kind: output, shape index: {0}]
  %s10 = inlined_call_operand.vmem [shape: f32[16,8], index: 10, kind: output, shape index: {1}]
  %11 = xla_tuple %s9, %s10
  %s12 = sld [smem:[#allocation0]]
  $region85: #{tpu_custom_call.1} parent=0
    _
  %s14 = ssub.s32 1, %s12
  %s15 = scalar_select 0, %s14, %s12
  $region1: #{tpu_custom_call.1} parent=0
    #allocation4 [shape = 'u8[512]{0}', space=smem, size = 0x200, scoped, tag = 'input window, operand 0, single buffered']
    #allocation5 [shape = 's32[2]{0}', space=sflag, size = 0x8, scoped, tag = 'scoped memory for tpu_custom_call.1']
    %16 = vsyncpa [#allocation5], 0
    loop: start=0, step=1, limit=4
    $region2: #{tpu_custom_call.1} parent=1 // loop_pre_header
      _
    $region3: #{tpu_custom_call.1} parent=1 // loop_header
      %s18 = sphi 0, %s22
      %p19 = scmp.ge.s32.totalorder %s18, 4
      %s26 = sphi 0, %s26
      %s28 = sphi 0, %s26
      %s29 = sphi 0, %s28
      %s43 = sphi 0, %s29
      %s47 = sphi 0, %s47
      %s49 = sphi 0, %s47
      %s50 = sphi 0, %s49
      %s64 = sphi 0, %s50
      %s68 = sphi 0, %s68
      %s70 = sphi 0, %s68
      %s71 = sphi 0, %s70
      %s85 = sphi 0, %s71
      %s91 = sphi 0, %s93
      %s94 = sphi 0, %s91
      %s95 = sphi 0, %s94
      %s111 = sphi 0, %s95
      %s117 = sphi 0, %s119
      %s120 = sphi 0, %s117
      %s121 = sphi 0, %s120
      %s137 = sphi 0, %s121
      %s141 = sphi 0, %s141
      %s143 = sphi 0, %s141
      %s144 = sphi 0, %s143
      %s158 = sphi 0, %s144
      %s162 = sphi 0, %s162
      %s164 = sphi 0, %s162
      %s165 = sphi 0, %s164
      %s179 = sphi 0, %s165
      %s183 = sphi 0, %s183
      %s185 = sphi 0, %s183
      %s186 = sphi 0, %s185
      %s200 = sphi 0, %s186
      %s204 = sphi 0, %s204
      %s206 = sphi 0, %s204
      %s207 = sphi 0, %s206
      %s221 = sphi 0, %s207
      %s227 = sphi 0, %s229
      %s230 = sphi 0, %s227
      %s231 = sphi 0, %s230
      %s247 = sphi 0, %s231
      %s253 = sphi 0, %s255
      %s256 = sphi 0, %s253
      %s257 = sphi 0, %s256
      %s273 = sphi 0, %s257
    $region4: #{tpu_custom_call.1} parent=1 // loop_header_branch
      %21 = sbr.rel (%p19) target = $region8
    $region5: #{tpu_custom_call.1} parent=1 // loop_body
      %s23 = ssub.s32 %s18, 1
      %s24 = ssub.s32 %s18, 2
      %s25 = sadd.s32 %s18, 1
      %s27 = sadd.s32 %s26, 1
      %p30 = scmp.eq.s32.totalorder %s18, 1
      %p31 = scmp.ne.s32.totalorder %s26, %s28
      %p32 = scmp.eq.s32.totalorder %s18, 0
      %p33 = por %p31, %p32
      %p34 = scmp.ne.s32.totalorder %s26, %s28
      %p35 = scmp.eq.s32.totalorder %s23, 1
      %p36 = por %p34, %p35
      %p37 = scmp.ne.s32.totalorder %s28, %s29
      %p38 = scmp.eq.s32.totalorder %s23, 0
      %p39 = por %p37, %p38
      %p40 = scmp.ne.s32.totalorder %s28, %s29
      %p41 = scmp.eq.s32.totalorder %s24, 1
      %p42 = por %p40, %p41
      %p44 = scmp.ne.s32.totalorder %s29, %s43
      %p45 = scmp.eq.s32.totalorder %s24, 0
      %p46 = por %p44, %p45
      %s48 = sadd.s32 %s47, 1
      %p51 = scmp.eq.s32.totalorder %s18, 1
      %p52 = scmp.ne.s32.totalorder %s47, %s49
      %p53 = scmp.eq.s32.totalorder %s18, 0
      %p54 = por %p52, %p53
      %p55 = scmp.ne.s32.totalorder %s47, %s49
      %p56 = scmp.eq.s32.totalorder %s23, 1
      %p57 = por %p55, %p56
      %p58 = scmp.ne.s32.totalorder %s49, %s50
      %p59 = scmp.eq.s32.totalorder %s23, 0
      %p60 = por %p58, %p59
      %p61 = scmp.ne.s32.totalorder %s49, %s50
      %p62 = scmp.eq.s32.totalorder %s24, 1
      %p63 = por %p61, %p62
      %p65 = scmp.ne.s32.totalorder %s50, %s64
      %p66 = scmp.eq.s32.totalorder %s24, 0
      %p67 = por %p65, %p66
      %s69 = sadd.s32 %s68, 1
      %p72 = scmp.eq.s32.totalorder %s18, 1
      %p73 = scmp.ne.s32.totalorder %s68, %s70
      %p74 = scmp.eq.s32.totalorder %s18, 0
      %p75 = por %p73, %p74
      %p76 = scmp.ne.s32.totalorder %s68, %s70
      %p77 = scmp.eq.s32.totalorder %s23, 1
      %p78 = por %p76, %p77
      %p79 = scmp.ne.s32.totalorder %s70, %s71
      %p80 = scmp.eq.s32.totalorder %s23, 0
      %p81 = por %p79, %p80
      %p82 = scmp.ne.s32.totalorder %s70, %s71
      %p83 = scmp.eq.s32.totalorder %s24, 1
      %p84 = por %p82, %p83
      %p86 = scmp.ne.s32.totalorder %s71, %s85
      %p87 = scmp.eq.s32.totalorder %s24, 0
      %p88 = por %p86, %p87
      %s89 = ssub.s32 %s18, %s25
      %p90 = scmp.eq.s32.totalorder %s89, 0
      %s92 = sadd.s32 %s91, 1
      %s93 = scalar_select %p90, %s91, %s92
      %p96 = pneg %p90
      %p97 = scmp.eq.s32.totalorder %s18, 1
      %p98 = por %p96, %p97
      %p99 = scmp.ne.s32.totalorder %s91, %s94
      %p100 = scmp.eq.s32.totalorder %s18, 0
      %p101 = por %p99, %p100
      %p102 = scmp.ne.s32.totalorder %s91, %s94
      %p103 = scmp.eq.s32.totalorder %s23, 1
      %p104 = por %p102, %p103
      %p105 = scmp.ne.s32.totalorder %s94, %s95
      %p106 = scmp.eq.s32.totalorder %s23, 0
      %p107 = por %p105, %p106
      %p108 = scmp.ne.s32.totalorder %s94, %s95
      %p109 = scmp.eq.s32.totalorder %s24, 1
      %p110 = por %p108, %p109
      %p112 = scmp.ne.s32.totalorder %s95, %s111
      %p113 = scmp.eq.s32.totalorder %s24, 0
      %p114 = por %p112, %p113
      %s115 = ssub.s32 %s18, %s25
      %p116 = scmp.eq.s32.totalorder %s115, 0
      %s118 = sadd.s32 %s117, 1
      %s119 = scalar_select %p116, %s117, %s118
      %p122 = pneg %p116
      %p123 = scmp.eq.s32.totalorder %s18, 1
      %p124 = por %p122, %p123
      %p125 = scmp.ne.s32.totalorder %s117, %s120
      %p126 = scmp.eq.s32.totalorder %s18, 0
      %p127 = por %p125, %p126
      %p128 = scmp.ne.s32.totalorder %s117, %s120
      %p129 = scmp.eq.s32.totalorder %s23, 1
      %p130 = por %p128, %p129
      %p131 = scmp.ne.s32.totalorder %s120, %s121
      %p132 = scmp.eq.s32.totalorder %s23, 0
      %p133 = por %p131, %p132
      %p134 = scmp.ne.s32.totalorder %s120, %s121
      %p135 = scmp.eq.s32.totalorder %s24, 1
      %p136 = por %p134, %p135
      %p138 = scmp.ne.s32.totalorder %s121, %s137
      %p139 = scmp.eq.s32.totalorder %s24, 0
      %p140 = por %p138, %p139
      %s142 = sadd.s32 %s141, 1
      %p145 = scmp.eq.s32.totalorder %s18, 1
      %p146 = scmp.ne.s32.totalorder %s141, %s143
      %p147 = scmp.eq.s32.totalorder %s18, 0
      %p148 = por %p146, %p147
      %p149 = scmp.ne.s32.totalorder %s141, %s143
      %p150 = scmp.eq.s32.totalorder %s23, 1
      %p151 = por %p149, %p150
      %p152 = scmp.ne.s32.totalorder %s143, %s144
      %p153 = scmp.eq.s32.totalorder %s23, 0
      %p154 = por %p152, %p153
      %p155 = scmp.ne.s32.totalorder %s143, %s144
      %p156 = scmp.eq.s32.totalorder %s24, 1
      %p157 = por %p155, %p156
      %p159 = scmp.ne.s32.totalorder %s144, %s158
      %p160 = scmp.eq.s32.totalorder %s24, 0
      %p161 = por %p159, %p160
      %s163 = sadd.s32 %s162, 1
      %p166 = scmp.eq.s32.totalorder %s18, 1
      %p167 = scmp.ne.s32.totalorder %s162, %s164
      %p168 = scmp.eq.s32.totalorder %s18, 0
      %p169 = por %p167, %p168
      %p170 = scmp.ne.s32.totalorder %s162, %s164
      %p171 = scmp.eq.s32.totalorder %s23, 1
      %p172 = por %p170, %p171
      %p173 = scmp.ne.s32.totalorder %s164, %s165
      %p174 = scmp.eq.s32.totalorder %s23, 0
      %p175 = por %p173, %p174
      %p176 = scmp.ne.s32.totalorder %s164, %s165
      %p177 = scmp.eq.s32.totalorder %s24, 1
      %p178 = por %p176, %p177
      %p180 = scmp.ne.s32.totalorder %s165, %s179
      %p181 = scmp.eq.s32.totalorder %s24, 0
      %p182 = por %p180, %p181
      %s184 = sadd.s32 %s183, 1
      %p187 = scmp.eq.s32.totalorder %s18, 1
      %p188 = scmp.ne.s32.totalorder %s183, %s185
      %p189 = scmp.eq.s32.totalorder %s18, 0
      %p190 = por %p188, %p189
      %p191 = scmp.ne.s32.totalorder %s183, %s185
      %p192 = scmp.eq.s32.totalorder %s23, 1
      %p193 = por %p191, %p192
      %p194 = scmp.ne.s32.totalorder %s185, %s186
      %p195 = scmp.eq.s32.totalorder %s23, 0
      %p196 = por %p194, %p195
      %p197 = scmp.ne.s32.totalorder %s185, %s186
      %p198 = scmp.eq.s32.totalorder %s24, 1
      %p199 = por %p197, %p198
      %p201 = scmp.ne.s32.totalorder %s186, %s200
      %p202 = scmp.eq.s32.totalorder %s24, 0
      %p203 = por %p201, %p202
      %s205 = sadd.s32 %s204, 1
      %p208 = scmp.eq.s32.totalorder %s18, 1
      %p209 = scmp.ne.s32.totalorder %s204, %s206
      %p210 = scmp.eq.s32.totalorder %s18, 0
      %p211 = por %p209, %p210
      %p212 = scmp.ne.s32.totalorder %s204, %s206
      %p213 = scmp.eq.s32.totalorder %s23, 1
      %p214 = por %p212, %p213
      %p215 = scmp.ne.s32.totalorder %s206, %s207
      %p216 = scmp.eq.s32.totalorder %s23, 0
      %p217 = por %p215, %p216
      %p218 = scmp.ne.s32.totalorder %s206, %s207
      %p219 = scmp.eq.s32.totalorder %s24, 1
      %p220 = por %p218, %p219
      %p222 = scmp.ne.s32.totalorder %s207, %s221
      %p223 = scmp.eq.s32.totalorder %s24, 0
      %p224 = por %p222, %p223
      %s225 = ssub.s32 %s18, %s25
      %p226 = scmp.eq.s32.totalorder %s225, 0
      %s228 = sadd.s32 %s227, 1
      %s229 = scalar_select %p226, %s227, %s228
      %p232 = pneg %p226
      %p233 = scmp.eq.s32.totalorder %s18, 1
      %p234 = por %p232, %p233
      %p235 = scmp.ne.s32.totalorder %s227, %s230
      %p236 = scmp.eq.s32.totalorder %s18, 0
      %p237 = por %p235, %p236
      %p238 = scmp.ne.s32.totalorder %s227, %s230
      %p239 = scmp.eq.s32.totalorder %s23, 1
      %p240 = por %p238, %p239
      %p241 = scmp.ne.s32.totalorder %s230, %s231
      %p242 = scmp.eq.s32.totalorder %s23, 0
      %p243 = por %p241, %p242
      %p244 = scmp.ne.s32.totalorder %s230, %s231
      %p245 = scmp.eq.s32.totalorder %s24, 1
      %p246 = por %p244, %p245
      %p248 = scmp.ne.s32.totalorder %s231, %s247
      %p249 = scmp.eq.s32.totalorder %s24, 0
      %p250 = por %p248, %p249
      %s251 = ssub.s32 %s18, %s25
      %p252 = scmp.eq.s32.totalorder %s251, 0
      %s254 = sadd.s32 %s253, 1
      %s255 = scalar_select %p252, %s253, %s254
      %p258 = pneg %p252
      %p259 = scmp.eq.s32.totalorder %s18, 1
      %p260 = por %p258, %p259
      %p261 = scmp.ne.s32.totalorder %s253, %s256
      %p262 = scmp.eq.s32.totalorder %s18, 0
      %p263 = por %p261, %p262
      %p264 = scmp.ne.s32.totalorder %s253, %s256
      %p265 = scmp.eq.s32.totalorder %s23, 1
      %p266 = por %p264, %p265
      %p267 = scmp.ne.s32.totalorder %s256, %s257
      %p268 = scmp.eq.s32.totalorder %s23, 0
      %p269 = por %p267, %p268
      %p270 = scmp.ne.s32.totalorder %s256, %s257
      %p271 = scmp.eq.s32.totalorder %s24, 1
      %p272 = por %p270, %p271
      %p274 = scmp.ne.s32.totalorder %s257, %s273
      %p275 = scmp.eq.s32.totalorder %s24, 0
      %p276 = por %p274, %p275
      %p277 = scmp.le.s32.totalorder 1, %s18
      %p278 = scmp.lt.s32.totalorder %s18, 3
      %p279 = pnand %p277, %p278
      %p280 = pneg %p279
      // Predicated region
      $region9: #{tpu_custom_call.1} parent=5 // pred_check
        _
      $region10: #{tpu_custom_call.1} parent=5 // pred_check_branch
        %282 = sbr.rel (%p279) target = $region12
      $region11: #{tpu_custom_call.1} parent=5 // pred_region
        %s283 = ssub.s32 %s18, 1
        // Predicated region
        $region13: #{tpu_custom_call.1} parent=11 // pred_check
          %p284 = pneg %p39
        $region14: #{tpu_custom_call.1} parent=11 // pred_check_branch
          %286 = sbr.rel (%p284) target = $region16
        $region15: #{tpu_custom_call.1} parent=11 // pred_region
          %s288 = ssub.s32 16, 16
          %289 = vsyncadd [#allocation5], %s288
          %s291 = sshll.u32 %s0, 4
          %s292 = int_to_ptr.vmem [resolvable:$true] %s291
          %294 = dma.vmem_to_smem %s292, 16, [#allocation4], [#allocation5]
        $region16: #{tpu_custom_call.1} parent=11 // pred_fallthru
          _
        // Predicated region
        $region17: #{tpu_custom_call.1} parent=11 // pred_check
          %p295 = pneg %p60
        $region18: #{tpu_custom_call.1} parent=11 // pred_check_branch
          %297 = sbr.rel (%p295) target = $region20
        $region19: #{tpu_custom_call.1} parent=11 // pred_region
          _
        $region20: #{tpu_custom_call.1} parent=11 // pred_fallthru
          _
        // Predicated region
        $region21: #{tpu_custom_call.1} parent=11 // pred_check
          %p298 = pneg %p81
        $region22: #{tpu_custom_call.1} parent=11 // pred_check_branch
          %300 = sbr.rel (%p298) target = $region24
        $region23: #{tpu_custom_call.1} parent=11 // pred_region
          _
        $region24: #{tpu_custom_call.1} parent=11 // pred_fallthru
          _
        // Predicated region
        $region25: #{tpu_custom_call.1} parent=11 // pred_check
          %p301 = pneg %p154
        $region26: #{tpu_custom_call.1} parent=11 // pred_check_branch
          %303 = sbr.rel (%p301) target = $region28
        $region27: #{tpu_custom_call.1} parent=11 // pred_region
          _
        $region28: #{tpu_custom_call.1} parent=11 // pred_fallthru
          _
        // Predicated region
        $region29: #{tpu_custom_call.1} parent=11 // pred_check
          %p304 = pneg %p175
        $region30: #{tpu_custom_call.1} parent=11 // pred_check_branch
          %306 = sbr.rel (%p304) target = $region32
        $region31: #{tpu_custom_call.1} parent=11 // pred_region
          _
        $region32: #{tpu_custom_call.1} parent=11 // pred_fallthru
          _
        // Predicated region
        $region33: #{tpu_custom_call.1} parent=11 // pred_check
          %p307 = pneg %p196
        $region34: #{tpu_custom_call.1} parent=11 // pred_check_branch
          %309 = sbr.rel (%p307) target = $region36
        $region35: #{tpu_custom_call.1} parent=11 // pred_region
          _
        $region36: #{tpu_custom_call.1} parent=11 // pred_fallthru
          _
        // Predicated region
        $region37: #{tpu_custom_call.1} parent=11 // pred_check
          %p310 = pneg %p217
        $region38: #{tpu_custom_call.1} parent=11 // pred_check_branch
          %312 = sbr.rel (%p310) target = $region40
        $region39: #{tpu_custom_call.1} parent=11 // pred_region
          _
        $region40: #{tpu_custom_call.1} parent=11 // pred_fallthru
          _
      $region12: #{tpu_custom_call.1} parent=5 // pred_fallthru
        _
      %p313 = scmp.lt.s32.totalorder %s18, 2
      // Predicated region
      $region41: #{tpu_custom_call.1} parent=5 // pred_check
        %p314 = pneg %p313
      $region42: #{tpu_custom_call.1} parent=5 // pred_check_branch
        %316 = sbr.rel (%p314) target = $region44
      $region43: #{tpu_custom_call.1} parent=5 // pred_region
        // Predicated region
        $region45: #{tpu_custom_call.1} parent=43 // pred_check
          %p317 = pneg %p101
        $region46: #{tpu_custom_call.1} parent=43 // pred_check_branch
          %319 = sbr.rel (%p317) target = $region48
        $region47: #{tpu_custom_call.1} parent=43 // pred_region
          %p320 = scmp.lt.s32.totalorder %s18, 1
          %s321 = scalar_select %p320, %s18, 1
          %s322 = smul.addr %s321, 2
          %s323 = smul.addr %s322, 2
          %s324 = scalar_lea.vmem %s3, %s323
        $region48: #{tpu_custom_call.1} parent=43 // pred_fallthru
          _
        // Predicated region
        $region49: #{tpu_custom_call.1} parent=43 // pred_check
          %p325 = pneg %p127
        $region50: #{tpu_custom_call.1} parent=43 // pred_check_branch
          %327 = sbr.rel (%p325) target = $region52
        $region51: #{tpu_custom_call.1} parent=43 // pred_region
          %p328 = scmp.lt.s32.totalorder %s18, 1
          %s329 = scalar_select %p328, %s18, 1
          %s330 = smul.addr %s329, 2
          %s331 = smul.addr %s330, 2
          %s332 = scalar_lea.vmem %s4, %s331
        $region52: #{tpu_custom_call.1} parent=43 // pred_fallthru
          _
      $region44: #{tpu_custom_call.1} parent=5 // pred_fallthru
        _
      %p333 = scmp.le.s32.totalorder 1, %s18
      %p334 = scmp.lt.s32.totalorder %s18, 3
      %p335 = pnand %p333, %p334
      %p336 = pneg %p335
      // Predicated region
      $region53: #{tpu_custom_call.1} parent=5 // pred_check
        _
      $region54: #{tpu_custom_call.1} parent=5 // pred_check_branch
        %338 = sbr.rel (%p335) target = $region56
      $region55: #{tpu_custom_call.1} parent=5 // pred_region
        %s339 = ssub.s32 %s18, 1
        // Predicated region
        $region57: #{tpu_custom_call.1} parent=55 // pred_check
          %p340 = pneg %p39
        $region58: #{tpu_custom_call.1} parent=55 // pred_check_branch
          %342 = sbr.rel (%p340) target = $region60
        $region59: #{tpu_custom_call.1} parent=55 // pred_region
          %343 = dma.done [#allocation5], 16
        $region60: #{tpu_custom_call.1} parent=55 // pred_fallthru
          _
        %344 = sfence
        %p345 = pneg %p39
        %p346 = pneg %p36
        %p347 = pneg %p60
        %p348 = pneg %p57
        %p349 = pneg %p81
        %p350 = pneg %p78
        %p351 = scmp.lt.s32.totalorder %s23, 1
        %s352 = scalar_select %p351, %s23, 1
        %s353 = smul.addr %s352, 2
        %s354 = smul.addr %s353, 2
        %s355 = scalar_lea.vmem %s3, %s354
        %p356 = pneg %p107
        %p357 = pneg %p104
        %p358 = scmp.lt.s32.totalorder %s23, 1
        %s359 = scalar_select %p358, %s23, 1
        %s360 = smul.addr %s359, 2
        %s361 = smul.addr %s360, 2
        %s362 = scalar_lea.vmem %s4, %s361
        %p363 = pneg %p133
        %p364 = pneg %p130
        %p365 = pneg %p154
        %p366 = pneg %p151
        %p367 = pneg %p175
        %p368 = pneg %p172
        %p369 = pneg %p196
        %p370 = pneg %p193
        %p371 = pneg %p217
        %p372 = pneg %p214
        %p373 = pneg %p243
        %p374 = pneg %p240
        %p375 = scmp.lt.s32.totalorder %s23, 1
        %s376 = scalar_select %p375, %s23, 1
        %s377 = smul.addr %s376, 8
        %s378 = scalar_lea.vmem %s9, %s377
        %p379 = pneg %p269
        %p380 = pneg %p266
        %p381 = scmp.lt.s32.totalorder %s23, 1
        %s382 = scalar_select %p381, %s23, 1
        %s383 = smul.addr %s382, 8
        %s384 = scalar_lea.vmem %s10, %s383
        %p385 = scmp.lt.s32.totalorder %s23, 1
        %s386 = scalar_select %p385, %s23, 1
        %s387 = smul.addr %s386, 2
        %s388 = smul.addr %s387, 2
        %s389 = scalar_lea.vmem %s3, %s388
        %p390 = scmp.lt.s32.totalorder %s23, 1
        %s391 = scalar_select %p390, %s23, 1
        %s392 = smul.addr %s391, 2
        %s393 = smul.addr %s392, 2
        %s394 = scalar_lea.vmem %s4, %s393
        %p395 = scmp.lt.s32.totalorder %s23, 1
        %s396 = scalar_select %p395, %s23, 1
        %s397 = smul.addr %s396, 8
        %s398 = scalar_lea.vmem %s9, %s397
        %p399 = scmp.lt.s32.totalorder %s23, 1
        %s400 = scalar_select %p399, %s23, 1
        %s401 = smul.addr %s400, 8
        %s402 = scalar_lea.vmem %s10, %s401
        %s404 = smul.u32 %s23, 8
        %p405 = scmp.eq.s32.totalorder %s23, 0
        // Predicated region
        $region61: #{tpu_custom_call.1} parent=55 // pred_check
          %p406 = pneg %p405
        $region62: #{tpu_custom_call.1} parent=55 // pred_check_branch
          %408 = sbr.rel (%p406) target = $region64
        $region63: #{tpu_custom_call.1} parent=55 // pred_region
          %v409 = vld [vmem:[%s1] sm:$0xff]
          %v410 = vld [vmem:[%s1 + $0x8] sm:$0xff]
          %v411 = vpack.c.bf16 %v410, %v409
          %v412 = vld [vmem:[%s5] sm:$0xff]
          %v413 = vpack.c.bf16 %v412, %v412
          %vm414 = vcmask 64512
          %v416 = vsel %vm414, %v411, 0
          %vm418 = vcmask 1043456
          %v420 = vsel %vm418, %v413, 0
          %422 = vmatprep.subr.bf16.mxu0 0
          %423 = vmatpush1.bf16.msra.mxu0 0
          %424 = vmatprep.subr.bf16.mxu0 0
          %425 = vmatpush1.bf16.msra.mxu0 0
          %426 = vmatprep.subr.bf16.mxu0 0
          %427 = vmatpush1.bf16.msra.mxu0 0
          %428 = vmatprep.subr.bf16.mxu0 0
          %429 = vmatpush1.bf16.msra.mxu0 0
          %430 = vmatprep.subr.bf16.mxu0 0
          %431 = vmatpush1.bf16.msra.mxu0 0
          %432 = vmatprep.subr.bf16.mxu0 0
          %433 = vmatpush1.bf16.msra.mxu0 0
          %434 = vmatprep.subr.bf16.mxu0 0
          %435 = vmatpush1.bf16.msra.mxu0 0
          %436 = vmatprep.subr.bf16.mxu0 0
          %437 = vmatpush1.bf16.msra.mxu0 %v420
          %438 = vmatprep.subr.bf16.mxu0 0
          %439 = vmatpush2.bf16.msra.mxu0 0
          %440 = vmatprep.subr.bf16.mxu0 0
          %441 = vmatpush2.bf16.msra.mxu0 0
          %442 = vmatprep.subr.bf16.mxu0 0
          %443 = vmatpush2.bf16.msra.mxu0 0
          %444 = vmatprep.subr.bf16.mxu0 0
          %445 = vmatpush2.bf16.msra.mxu0 0
          %446 = vmatprep.subr.bf16.mxu0 0
          %447 = vmatpush2.bf16.msra.mxu0 0
          %448 = vmatprep.subr.bf16.mxu0 0
          %449 = vmatpush2.bf16.msra.mxu0 0
          %450 = vmatprep.subr.bf16.mxu0 0
          %451 = vmatpush2.bf16.msra.mxu0 0
          %452 = vmatprep.subr.bf16.mxu0 0
          %453 = vmatpush2.bf16.msra.mxu0 0
          %454 = vmatprep.mubr.bf16.mxu0 0
          %455 = vmatmul.mubr.bf16.gmra.mxu0 %v416
          %v456 = vpop.f32.mrf.mxu0
          %v457 = vadd.f32 0.0, %v456
          %v458 = vpop.f32.mrf.mxu0
          %v459 = vpop.f32.mrf.mxu0
          %v460 = vadd.f32 0.0, %v459
          %v461 = vpop.f32.mrf.mxu0
          %462 = vdwg.mxu0
          %v463 = vpack.c.bf16 %v460, %v457
          %v465 = vunpack.c.l.b16 %v463
          %v466 = vunpack.c.h.b16 %v463
          %v467 = vpack.c.b16 %v465, %v465
          %v468 = vpack.c.b16 %v466, %v466
          %vm471 = vcmask 125952
          %472 = vst.msk [vmem:[#allocation2] sm:$0xf] %vm471, %v467
          %473 = vst.msk [vmem:[#allocation2 + $0x4] sm:$0xf] %vm471, %v468
          %v474 = vld [vmem:[%s2] sm:$0xff]
          %v475 = vld [vmem:[%s2 + $0x8] sm:$0xff]
          %v476 = vpack.c.bf16 %v475, %v474
          %v477 = vld [vmem:[%s6] sm:$0xff]
          %v478 = vpack.c.bf16 %v477, %v477
          %v480 = vsel %vm414, %v476, 0
          %v483 = vsel %vm418, %v478, 0
          %485 = vmatprep.subr.bf16.mxu0 0
          %486 = vmatpush1.bf16.msra.mxu0 0
          %487 = vmatprep.subr.bf16.mxu0 0
          %488 = vmatpush1.bf16.msra.mxu0 0
          %489 = vmatprep.subr.bf16.mxu0 0
          %490 = vmatpush1.bf16.msra.mxu0 0
          %491 = vmatprep.subr.bf16.mxu0 0
          %492 = vmatpush1.bf16.msra.mxu0 0
          %493 = vmatprep.subr.bf16.mxu0 0
          %494 = vmatpush1.bf16.msra.mxu0 0
          %495 = vmatprep.subr.bf16.mxu0 0
          %496 = vmatpush1.bf16.msra.mxu0 0
          %497 = vmatprep.subr.bf16.mxu0 0
          %498 = vmatpush1.bf16.msra.mxu0 0
          %499 = vmatprep.subr.bf16.mxu0 0
          %500 = vmatpush1.bf16.msra.mxu0 %v483
          %501 = vmatprep.subr.bf16.mxu0 0
          %502 = vmatpush2.bf16.msra.mxu0 0
          %503 = vmatprep.subr.bf16.mxu0 0
          %504 = vmatpush2.bf16.msra.mxu0 0
          %505 = vmatprep.subr.bf16.mxu0 0
          %506 = vmatpush2.bf16.msra.mxu0 0
          %507 = vmatprep.subr.bf16.mxu0 0
          %508 = vmatpush2.bf16.msra.mxu0 0
          %509 = vmatprep.subr.bf16.mxu0 0
          %510 = vmatpush2.bf16.msra.mxu0 0
          %511 = vmatprep.subr.bf16.mxu0 0
          %512 = vmatpush2.bf16.msra.mxu0 0
          %513 = vmatprep.subr.bf16.mxu0 0
          %514 = vmatpush2.bf16.msra.mxu0 0
          %515 = vmatprep.subr.bf16.mxu0 0
          %516 = vmatpush2.bf16.msra.mxu0 0
          %517 = vmatprep.mubr.bf16.mxu0 0
          %518 = vmatmul.mubr.bf16.gmra.mxu0 %v480
          %v519 = vpop.f32.mrf.mxu0
          %v520 = vadd.f32 0.0, %v519
          %v521 = vpop.f32.mrf.mxu0
          %v522 = vpop.f32.mrf.mxu0
          %v523 = vadd.f32 0.0, %v522
          %v524 = vpop.f32.mrf.mxu0
          %525 = vdwg.mxu0
          %v526 = vpack.c.bf16 %v523, %v520
          %v528 = vunpack.c.l.b16 %v526
          %v529 = vunpack.c.h.b16 %v526
          %v530 = vpack.c.b16 %v528, %v528
          %v531 = vpack.c.b16 %v529, %v529
          %534 = vst.msk [vmem:[#allocation3] sm:$0xf] %vm471, %v530
          %535 = vst.msk [vmem:[#allocation3 + $0x4] sm:$0xf] %vm471, %v531
        $region64: #{tpu_custom_call.1} parent=55 // pred_fallthru
          _
        %v536 = vld [vmem:[%s7] sm:$0xff]
        %v537 = vld [vmem:[%s7 + $0x8] sm:$0xf]
        %s538 = sshra.s32 %s404, 3
        %s539 = sand.u32 %s404, 7
        %s540 = smul.addr %s538, 4
        %s541 = scalar_lea.vmem [#allocation2], %s540
        %v542 = vld [vmem:[%s541] sm:$0xf]
        %s543 = smul.addr %s538, 4
        %s544 = scalar_lea.vmem [#allocation3], %s543
        %v545 = vld [vmem:[%s544] sm:$0xf]
        %v546 = vld [vmem:[#allocation2] sm:$0xf]
        %v547 = vld [vmem:[#allocation2 + $0x4] sm:$0x7]
        %v548 = vld [vmem:[#allocation3] sm:$0xf]
        %v549 = vld [vmem:[#allocation3 + $0x4] sm:$0x1]
        %v550 = vld [vmem:[%s389] sm:$0x3]
        %v551 = vunpack.c.l.bf16 %v542
        %v552 = vlaneseq
        %v553 = vshrl.u32 %v552, 7
        %v554 = vsub.s32 1, %v553
        %v555 = vrot.slane %v536, %v554
        %v556 = vmul.f32 %v551, %v555
        %vm557 = vcmask 64512
        %v558 = vsel %vm557, %v556, 0.0
        %559 = vadd.xlane.f32.xlu0 %v558
        %v560 = vpop.xlane.xlu0 %559
        %v561 = vpack.c.bf16 %v536, %v536
        %v564 = vunpack.c.l.b16 %v546
        %v565 = vunpack.c.l.b16 %v547
        %v566 = vpack.c.b16 %v565, %v564
        %v568 = vsel %vm557, %v561, 0
        %v571 = vsel %vm557, %v566, 0
        %573 = vmatprep.subr.bf16.mxu0 0
        %574 = vmatpush1.bf16.xpose.msra.mxu0 0
        %575 = vmatprep.subr.bf16.mxu0 0
        %576 = vmatpush1.bf16.xpose.msra.mxu0 0
        %577 = vmatprep.subr.bf16.mxu0 0
        %578 = vmatpush1.bf16.xpose.msra.mxu0 0
        %579 = vmatprep.subr.bf16.mxu0 0
        %580 = vmatpush1.bf16.xpose.msra.mxu0 0
        %581 = vmatprep.subr.bf16.mxu0 0
        %582 = vmatpush1.bf16.xpose.msra.mxu0 0
        %583 = vmatprep.subr.bf16.mxu0 0
        %584 = vmatpush1.bf16.xpose.msra.mxu0 0
        %585 = vmatprep.subr.bf16.mxu0 0
        %586 = vmatpush1.bf16.xpose.msra.mxu0 0
        %587 = vmatprep.subr.bf16.mxu0 0
        %588 = vmatpush1.bf16.xpose.msra.mxu0 %v571
        %589 = vmatprep.subr.bf16.mxu0 0
        %590 = vmatpush2.bf16.xpose.msra.mxu0 0
        %591 = vmatprep.subr.bf16.mxu0 0
        %592 = vmatpush2.bf16.xpose.msra.mxu0 0
        %593 = vmatprep.subr.bf16.mxu0 0
        %594 = vmatpush2.bf16.xpose.msra.mxu0 0
        %595 = vmatprep.subr.bf16.mxu0 0
        %596 = vmatpush2.bf16.xpose.msra.mxu0 0
        %597 = vmatprep.subr.bf16.mxu0 0
        %598 = vmatpush2.bf16.xpose.msra.mxu0 0
        %599 = vmatprep.subr.bf16.mxu0 0
        %600 = vmatpush2.bf16.xpose.msra.mxu0 0
        %601 = vmatprep.subr.bf16.mxu0 0
        %602 = vmatpush2.bf16.xpose.msra.mxu0 0
        %603 = vmatprep.subr.bf16.mxu0 0
        %604 = vmatpush2.bf16.xpose.msra.mxu0 0
        %605 = vmatprep.mubr.bf16.mxu0 0
        %606 = vmatmul.mubr.bf16.gmra.mxu0 %v568
        %v607 = vpop.f32.mrf.mxu0
        %v608 = vadd.f32 0.0, %v607
        %v609 = vpop.f32.mrf.mxu0
        %v610 = vpop.f32.mrf.mxu0
        %v611 = vpop.f32.mrf.mxu0
        %612 = vdwg.mxu0
        %v613 = vlaneseq
        %v614 = vshrl.u32 %v613, 7
        %v615 = vsub.s32 0, %v614
        %v616 = vrot.slane %v608, %v615
        %v617 = vadd.f32 %v560, %v616
        %vm618 = vcmp.gt.f32.partialorder %v617, 0.0
        %v619 = vmul.f32 %v617, 0.2
        %v620 = vsel %vm618, %v617, %v619
        %v621 = vunpack.c.0.s8 %v550
        %v622 = vcvt.s32.f32 %v621
        %vm623 = vcmp.gt.f32.partialorder %v622, 0.0
        %v624 = vsel %vm623, %v620, -1e+30
        %vm625 = vcmask 113664
        %v626 = vsel %vm625, %v624, -inf
        %627 = vmax.xlane.f32.xlu0 %v626
        %v628 = vpop.xlane.xlu0 %627
        %v629 = vsub.f32 %v624, %v628
        %v630 = vmul.f32 %v629, 1.442695
        %v631 = vpow.pop %v630
        %v632 = vsel %vm625, %v631, 0.0
        %633 = vadd.xlane.f32.xlu0 %v632
        %v634 = vpop.xlane.xlu0 %633
        %v635 = vrcp.pop %v634
        %v636 = vmul.f32 %v631, %v635
        %v637 = vpack.c.bf16 %v636, %v636
        %v638 = vlaneseq
        %v639 = vshrl.u32 %v638, 7
        %v640 = vsub.s32 2, %v639
        %v641 = vrot.slane %v536, %v640
        %v643 = vsel %vm625, %v637, 0
        %vm645 = vcmask 1046528
        %v646 = vsel %vm645, %v566, 0
        %648 = vmatprep.subr.bf16.mxu0 0
        %649 = vmatpush1.bf16.msra.mxu0 0
        %650 = vmatprep.subr.bf16.mxu0 0
        %651 = vmatpush1.bf16.msra.mxu0 0
        %652 = vmatprep.subr.bf16.mxu0 0
        %653 = vmatpush1.bf16.msra.mxu0 0
        %654 = vmatprep.subr.bf16.mxu0 0
        %655 = vmatpush1.bf16.msra.mxu0 0
        %656 = vmatprep.subr.bf16.mxu0 0
        %657 = vmatpush1.bf16.msra.mxu0 0
        %658 = vmatprep.subr.bf16.mxu0 0
        %659 = vmatpush1.bf16.msra.mxu0 0
        %660 = vmatprep.subr.bf16.mxu0 0
        %661 = vmatpush1.bf16.msra.mxu0 0
        %662 = vmatprep.subr.bf16.mxu0 0
        %663 = vmatpush1.bf16.msra.mxu0 %v646
        %664 = vmatprep.subr.bf16.mxu0 0
        %665 = vmatpush2.bf16.msra.mxu0 0
        %666 = vmatprep.subr.bf16.mxu0 0
        %667 = vmatpush2.bf16.msra.mxu0 0
        %668 = vmatprep.subr.bf16.mxu0 0
        %669 = vmatpush2.bf16.msra.mxu0 0
        %670 = vmatprep.subr.bf16.mxu0 0
        %671 = vmatpush2.bf16.msra.mxu0 0
        %672 = vmatprep.subr.bf16.mxu0 0
        %673 = vmatpush2.bf16.msra.mxu0 0
        %674 = vmatprep.subr.bf16.mxu0 0
        %675 = vmatpush2.bf16.msra.mxu0 0
        %676 = vmatprep.subr.bf16.mxu0 0
        %677 = vmatpush2.bf16.msra.mxu0 0
        %678 = vmatprep.subr.bf16.mxu0 0
        %679 = vmatpush2.bf16.msra.mxu0 0
        %680 = vmatprep.mubr.bf16.mxu0 0
        %681 = vmatmul.mubr.bf16.gmra.mxu0 %v643
        %v682 = vpop.f32.mrf.mxu0
        %v683 = vadd.f32 %v641, %v682
        %v684 = vpop.f32.mrf.mxu0
        %v685 = vpop.f32.mrf.mxu0
        %v686 = vpop.f32.mrf.mxu0
        %687 = vdwg.mxu0
        %s688 = scalar_lea.vmem %s389, 2
        %v689 = vld [vmem:[%s688] sm:$0x3]
        %v690 = vlaneseq
        %v691 = vshrl.u32 %v690, 7
        %v692 = vsub.s32 4, %v691
        %v693 = vrot.slane %v536, %v692
        %695 = vrot.lane.b32.xlu0 %v693, 8
        %v696 = vpop.permute.xlu0 %695
        %v698 = vmul.f32 %v551, %v696
        %700 = vrot.lane.b32.xlu0 %v698, 120
        %v701 = vpop.permute.xlu0 %700
        %v703 = vsel %vm557, %v701, 0.0
        %704 = vadd.xlane.f32.xlu0 %v703
        %v705 = vpop.xlane.xlu0 %704
        %v706 = vshrl.u32 %v561, 16
        %v708 = vrot.slane %v706, 1
        %709 = vrot.lane.b32.xlu0 %v566, 120
        %v710 = vpop.permute.xlu0 %709
        %v712 = vsel %vm557, %v708, 0
        %v715 = vsel %vm557, %v710, 0
        %717 = vmatprep.subr.bf16.mxu0 0
        %718 = vmatpush1.bf16.xpose.msra.mxu0 0
        %719 = vmatprep.subr.bf16.mxu0 0
        %720 = vmatpush1.bf16.xpose.msra.mxu0 0
        %721 = vmatprep.subr.bf16.mxu0 0
        %722 = vmatpush1.bf16.xpose.msra.mxu0 0
        %723 = vmatprep.subr.bf16.mxu0 0
        %724 = vmatpush1.bf16.xpose.msra.mxu0 0
        %725 = vmatprep.subr.bf16.mxu0 0
        %726 = vmatpush1.bf16.xpose.msra.mxu0 0
        %727 = vmatprep.subr.bf16.mxu0 0
        %728 = vmatpush1.bf16.xpose.msra.mxu0 0
        %729 = vmatprep.subr.bf16.mxu0 0
        %730 = vmatpush1.bf16.xpose.msra.mxu0 0
        %731 = vmatprep.subr.bf16.mxu0 0
        %732 = vmatpush1.bf16.xpose.msra.mxu0 %v715
        %733 = vmatprep.subr.bf16.mxu0 0
        %734 = vmatpush2.bf16.xpose.msra.mxu0 0
        %735 = vmatprep.subr.bf16.mxu0 0
        %736 = vmatpush2.bf16.xpose.msra.mxu0 0
        %737 = vmatprep.subr.bf16.mxu0 0
        %738 = vmatpush2.bf16.xpose.msra.mxu0 0
        %739 = vmatprep.subr.bf16.mxu0 0
        %740 = vmatpush2.bf16.xpose.msra.mxu0 0
        %741 = vmatprep.subr.bf16.mxu0 0
        %742 = vmatpush2.bf16.xpose.msra.mxu0 0
        %743 = vmatprep.subr.bf16.mxu0 0
        %744 = vmatpush2.bf16.xpose.msra.mxu0 0
        %745 = vmatprep.subr.bf16.mxu0 0
        %746 = vmatpush2.bf16.xpose.msra.mxu0 0
        %747 = vmatprep.subr.bf16.mxu0 0
        %748 = vmatpush2.bf16.xpose.msra.mxu0 0
        %749 = vmatprep.mubr.bf16.mxu0 0
        %750 = vmatmul.mubr.bf16.gmra.mxu0 %v712
        %v751 = vpop.f32.mrf.mxu0
        %v752 = vadd.f32 0.0, %v751
        %v753 = vpop.f32.mrf.mxu0
        %v754 = vpop.f32.mrf.mxu0
        %v755 = vpop.f32.mrf.mxu0
        %756 = vdwg.mxu0
        %v757 = vlaneseq
        %v758 = vshrl.u32 %v757, 7
        %v759 = vsub.s32 0, %v758
        %v760 = vrot.slane %v752, %v759
        %v761 = vadd.f32 %v705, %v760
        %vm762 = vcmp.gt.f32.partialorder %v761, 0.0
        %v763 = vmul.f32 %v761, 0.2
        %v764 = vsel %vm762, %v761, %v763
        %v765 = vunpack.c.0.s8 %v689
        %v766 = vcvt.s32.f32 %v765
        %vm767 = vcmp.gt.f32.partialorder %v766, 0.0
        %v768 = vsel %vm767, %v764, -1e+30
        %v769 = vsel %vm625, %v768, -inf
        %770 = vmax.xlane.f32.xlu0 %v769
        %v771 = vpop.xlane.xlu0 %770
        %v772 = vsub.f32 %v768, %v771
        %v773 = vmul.f32 %v772, 1.442695
        %v774 = vpow.pop %v773
        %v775 = vsel %vm625, %v774, 0.0
        %776 = vadd.xlane.f32.xlu0 %v775
        %v777 = vpop.xlane.xlu0 %776
        %v778 = vrcp.pop %v777
        %v779 = vmul.f32 %v774, %v778
        %v780 = vpack.c.bf16 %v779, %v779
        %v781 = vlaneseq
        %v782 = vshrl.u32 %v781, 7
        %v783 = vsub.s32 5, %v782
        %v784 = vrot.slane %v536, %v783
        %v786 = vsel %vm625, %v780, 0
        %v788 = vsel %vm645, %v710, 0
        %790 = vmatprep.subr.bf16.mxu0 0
        %791 = vmatpush1.bf16.msra.mxu0 0
        %792 = vmatprep.subr.bf16.mxu0 0
        %793 = vmatpush1.bf16.msra.mxu0 0
        %794 = vmatprep.subr.bf16.mxu0 0
        %795 = vmatpush1.bf16.msra.mxu0 0
        %796 = vmatprep.subr.bf16.mxu0 0
        %797 = vmatpush1.bf16.msra.mxu0 0
        %798 = vmatprep.subr.bf16.mxu0 0
        %799 = vmatpush1.bf16.msra.mxu0 0
        %800 = vmatprep.subr.bf16.mxu0 0
        %801 = vmatpush1.bf16.msra.mxu0 0
        %802 = vmatprep.subr.bf16.mxu0 0
        %803 = vmatpush1.bf16.msra.mxu0 0
        %804 = vmatprep.subr.bf16.mxu0 0
        %805 = vmatpush1.bf16.msra.mxu0 %v788
        %806 = vmatprep.subr.bf16.mxu0 0
        %807 = vmatpush2.bf16.msra.mxu0 0
        %808 = vmatprep.subr.bf16.mxu0 0
        %809 = vmatpush2.bf16.msra.mxu0 0
        %810 = vmatprep.subr.bf16.mxu0 0
        %811 = vmatpush2.bf16.msra.mxu0 0
        %812 = vmatprep.subr.bf16.mxu0 0
        %813 = vmatpush2.bf16.msra.mxu0 0
        %814 = vmatprep.subr.bf16.mxu0 0
        %815 = vmatpush2.bf16.msra.mxu0 0
        %816 = vmatprep.subr.bf16.mxu0 0
        %817 = vmatpush2.bf16.msra.mxu0 0
        %818 = vmatprep.subr.bf16.mxu0 0
        %819 = vmatpush2.bf16.msra.mxu0 0
        %820 = vmatprep.subr.bf16.mxu0 0
        %821 = vmatpush2.bf16.msra.mxu0 0
        %822 = vmatprep.mubr.bf16.mxu0 0
        %823 = vmatmul.mubr.bf16.gmra.mxu0 %v786
        %v824 = vpop.f32.mrf.mxu0
        %v825 = vadd.f32 %v784, %v824
        %v826 = vpop.f32.mrf.mxu0
        %v827 = vpop.f32.mrf.mxu0
        %v828 = vpop.f32.mrf.mxu0
        %829 = vdwg.mxu0
        %v830 = vld [vmem:[%s394] sm:$0x3]
        %v831 = vunpack.c.l.bf16 %v545
        %v832 = vlaneseq
        %v833 = vshrl.u32 %v832, 7
        %v834 = vsub.s32 7, %v833
        %v835 = vrot.slane %v536, %v834
        %v836 = vmul.f32 %v831, %v835
        %v837 = vsel %vm557, %v836, 0.0
        %838 = vadd.xlane.f32.xlu0 %v837
        %v839 = vpop.xlane.xlu0 %838
        %v841 = vrot.slane %v561, 3
        %v844 = vunpack.c.l.b16 %v548
        %v845 = vunpack.c.l.b16 %v549
        %v846 = vpack.c.b16 %v845, %v844
        %v848 = vsel %vm557, %v841, 0
        %v851 = vsel %vm557, %v846, 0
        %853 = vmatprep.subr.bf16.mxu0 0
        %854 = vmatpush1.bf16.xpose.msra.mxu0 0
        %855 = vmatprep.subr.bf16.mxu0 0
        %856 = vmatpush1.bf16.xpose.msra.mxu0 0
        %857 = vmatprep.subr.bf16.mxu0 0
        %858 = vmatpush1.bf16.xpose.msra.mxu0 0
        %859 = vmatprep.subr.bf16.mxu0 0
        %860 = vmatpush1.bf16.xpose.msra.mxu0 0
        %861 = vmatprep.subr.bf16.mxu0 0
        %862 = vmatpush1.bf16.xpose.msra.mxu0 0
        %863 = vmatprep.subr.bf16.mxu0 0
        %864 = vmatpush1.bf16.xpose.msra.mxu0 0
        %865 = vmatprep.subr.bf16.mxu0 0
        %866 = vmatpush1.bf16.xpose.msra.mxu0 0
        %867 = vmatprep.subr.bf16.mxu0 0
        %868 = vmatpush1.bf16.xpose.msra.mxu0 %v851
        %869 = vmatprep.subr.bf16.mxu0 0
        %870 = vmatpush2.bf16.xpose.msra.mxu0 0
        %871 = vmatprep.subr.bf16.mxu0 0
        %872 = vmatpush2.bf16.xpose.msra.mxu0 0
        %873 = vmatprep.subr.bf16.mxu0 0
        %874 = vmatpush2.bf16.xpose.msra.mxu0 0
        %875 = vmatprep.subr.bf16.mxu0 0
        %876 = vmatpush2.bf16.xpose.msra.mxu0 0
        %877 = vmatprep.subr.bf16.mxu0 0
        %878 = vmatpush2.bf16.xpose.msra.mxu0 0
        %879 = vmatprep.subr.bf16.mxu0 0
        %880 = vmatpush2.bf16.xpose.msra.mxu0 0
        %881 = vmatprep.subr.bf16.mxu0 0
        %882 = vmatpush2.bf16.xpose.msra.mxu0 0
        %883 = vmatprep.subr.bf16.mxu0 0
        %884 = vmatpush2.bf16.xpose.msra.mxu0 0
        %885 = vmatprep.mubr.bf16.mxu0 0
        %886 = vmatmul.mubr.bf16.gmra.mxu0 %v848
        %v887 = vpop.f32.mrf.mxu0
        %v888 = vadd.f32 0.0, %v887
        %v889 = vpop.f32.mrf.mxu0
        %v890 = vpop.f32.mrf.mxu0
        %v891 = vpop.f32.mrf.mxu0
        %892 = vdwg.mxu0
        %v893 = vlaneseq
        %v894 = vshrl.u32 %v893, 7
        %v895 = vsub.s32 0, %v894
        %v896 = vrot.slane %v888, %v895
        %v897 = vadd.f32 %v839, %v896
        %vm898 = vcmp.gt.f32.partialorder %v897, 0.0
        %v899 = vmul.f32 %v897, 0.2
        %v900 = vsel %vm898, %v897, %v899
        %v901 = vunpack.c.0.s8 %v830
        %v902 = vcvt.s32.f32 %v901
        %vm903 = vcmp.gt.f32.partialorder %v902, 0.0
        %v904 = vsel %vm903, %v900, -1e+30
        %vm905 = vcmask 80896
        %v906 = vsel %vm905, %v904, -inf
        %907 = vmax.xlane.f32.xlu0 %v906
        %v908 = vpop.xlane.xlu0 %907
        %v909 = vsub.f32 %v904, %v908
        %v910 = vmul.f32 %v909, 1.442695
        %v911 = vpow.pop %v910
        %v912 = vsel %vm905, %v911, 0.0
        %913 = vadd.xlane.f32.xlu0 %v912
        %v914 = vpop.xlane.xlu0 %913
        %v915 = vrcp.pop %v914
        %v916 = vmul.f32 %v911, %v915
        %v917 = vpack.c.bf16 %v916, %v916
        %v918 = vlaneseq
        %v919 = vshrl.u32 %v918, 7
        %v920 = vsub.s32 0, %v919
        %v921 = vrot.slane %v537, %v920
        %v923 = vsel %vm905, %v917, 0
        %vm925 = vcmask 1044480
        %v926 = vsel %vm925, %v846, 0
        %928 = vmatprep.subr.bf16.mxu0 0
        %929 = vmatpush1.bf16.msra.mxu0 0
        %930 = vmatprep.subr.bf16.mxu0 0
        %931 = vmatpush1.bf16.msra.mxu0 0
        %932 = vmatprep.subr.bf16.mxu0 0
        %933 = vmatpush1.bf16.msra.mxu0 0
        %934 = vmatprep.subr.bf16.mxu0 0
        %935 = vmatpush1.bf16.msra.mxu0 0
        %936 = vmatprep.subr.bf16.mxu0 0
        %937 = vmatpush1.bf16.msra.mxu0 0
        %938 = vmatprep.subr.bf16.mxu0 0
        %939 = vmatpush1.bf16.msra.mxu0 0
        %940 = vmatprep.subr.bf16.mxu0 0
        %941 = vmatpush1.bf16.msra.mxu0 0
        %942 = vmatprep.subr.bf16.mxu0 0
        %943 = vmatpush1.bf16.msra.mxu0 %v926
        %944 = vmatprep.subr.bf16.mxu0 0
        %945 = vmatpush2.bf16.msra.mxu0 0
        %946 = vmatprep.subr.bf16.mxu0 0
        %947 = vmatpush2.bf16.msra.mxu0 0
        %948 = vmatprep.subr.bf16.mxu0 0
        %949 = vmatpush2.bf16.msra.mxu0 0
        %950 = vmatprep.subr.bf16.mxu0 0
        %951 = vmatpush2.bf16.msra.mxu0 0
        %952 = vmatprep.subr.bf16.mxu0 0
        %953 = vmatpush2.bf16.msra.mxu0 0
        %954 = vmatprep.subr.bf16.mxu0 0
        %955 = vmatpush2.bf16.msra.mxu0 0
        %956 = vmatprep.subr.bf16.mxu0 0
        %957 = vmatpush2.bf16.msra.mxu0 0
        %958 = vmatprep.subr.bf16.mxu0 0
        %959 = vmatpush2.bf16.msra.mxu0 0
        %960 = vmatprep.mubr.bf16.mxu0 0
        %961 = vmatmul.mubr.bf16.gmra.mxu0 %v923
        %v962 = vpop.f32.mrf.mxu0
        %v963 = vadd.f32 %v921, %v962
        %v964 = vpop.f32.mrf.mxu0
        %v965 = vpop.f32.mrf.mxu0
        %v966 = vpop.f32.mrf.mxu0
        %967 = vdwg.mxu0
        %s968 = scalar_lea.vmem %s394, 2
        %v969 = vld [vmem:[%s968] sm:$0x3]
        %v970 = vlaneseq
        %v971 = vshrl.u32 %v970, 7
        %v972 = vsub.s32 2, %v971
        %v973 = vrot.slane %v537, %v972
        %975 = vrot.lane.b32.xlu0 %v973, 8
        %v976 = vpop.permute.xlu0 %975
        %v978 = vmul.f32 %v831, %v976
        %980 = vrot.lane.b32.xlu0 %v978, 120
        %v981 = vpop.permute.xlu0 %980
        %v983 = vsel %vm557, %v981, 0.0
        %984 = vadd.xlane.f32.xlu0 %v983
        %v985 = vpop.xlane.xlu0 %984
        %v986 = vpack.c.bf16 %v537, %v537
        %v988 = vshrl.u32 %v986, 16
        %990 = vrot.lane.b32.xlu0 %v846, 120
        %v991 = vpop.permute.xlu0 %990
        %v993 = vsel %vm557, %v988, 0
        %v996 = vsel %vm557, %v991, 0
        %998 = vmatprep.subr.bf16.mxu0 0
        %999 = vmatpush1.bf16.xpose.msra.mxu0 0
        %1000 = vmatprep.subr.bf16.mxu0 0
        %1001 = vmatpush1.bf16.xpose.msra.mxu0 0
        %1002 = vmatprep.subr.bf16.mxu0 0
        %1003 = vmatpush1.bf16.xpose.msra.mxu0 0
        %1004 = vmatprep.subr.bf16.mxu0 0
        %1005 = vmatpush1.bf16.xpose.msra.mxu0 0
        %1006 = vmatprep.subr.bf16.mxu0 0
        %1007 = vmatpush1.bf16.xpose.msra.mxu0 0
        %1008 = vmatprep.subr.bf16.mxu0 0
        %1009 = vmatpush1.bf16.xpose.msra.mxu0 0
        %1010 = vmatprep.subr.bf16.mxu0 0
        %1011 = vmatpush1.bf16.xpose.msra.mxu0 0
        %1012 = vmatprep.subr.bf16.mxu0 0
        %1013 = vmatpush1.bf16.xpose.msra.mxu0 %v996
        %1014 = vmatprep.subr.bf16.mxu0 0
        %1015 = vmatpush2.bf16.xpose.msra.mxu0 0
        %1016 = vmatprep.subr.bf16.mxu0 0
        %1017 = vmatpush2.bf16.xpose.msra.mxu0 0
        %1018 = vmatprep.subr.bf16.mxu0 0
        %1019 = vmatpush2.bf16.xpose.msra.mxu0 0
        %1020 = vmatprep.subr.bf16.mxu0 0
        %1021 = vmatpush2.bf16.xpose.msra.mxu0 0
        %1022 = vmatprep.subr.bf16.mxu0 0
        %1023 = vmatpush2.bf16.xpose.msra.mxu0 0
        %1024 = vmatprep.subr.bf16.mxu0 0
        %1025 = vmatpush2.bf16.xpose.msra.mxu0 0
        %1026 = vmatprep.subr.bf16.mxu0 0
        %1027 = vmatpush2.bf16.xpose.msra.mxu0 0
        %1028 = vmatprep.subr.bf16.mxu0 0
        %1029 = vmatpush2.bf16.xpose.msra.mxu0 0
        %1030 = vmatprep.mubr.bf16.mxu0 0
        %1031 = vmatmul.mubr.bf16.gmra.mxu0 %v993
        %v1032 = vpop.f32.mrf.mxu0
        %v1033 = vadd.f32 0.0, %v1032
        %v1034 = vpop.f32.mrf.mxu0
        %v1035 = vpop.f32.mrf.mxu0
        %v1036 = vpop.f32.mrf.mxu0
        %1037 = vdwg.mxu0
        %v1038 = vlaneseq
        %v1039 = vshrl.u32 %v1038, 7
        %v1040 = vsub.s32 0, %v1039
        %v1041 = vrot.slane %v1033, %v1040
        %v1042 = vadd.f32 %v985, %v1041
        %vm1043 = vcmp.gt.f32.partialorder %v1042, 0.0
        %v1044 = vmul.f32 %v1042, 0.2
        %v1045 = vsel %vm1043, %v1042, %v1044
        %v1046 = vunpack.c.0.s8 %v969
        %v1047 = vcvt.s32.f32 %v1046
        %vm1048 = vcmp.gt.f32.partialorder %v1047, 0.0
        %v1049 = vsel %vm1048, %v1045, -1e+30
        %v1050 = vsel %vm905, %v1049, -inf
        %1051 = vmax.xlane.f32.xlu0 %v1050
        %v1052 = vpop.xlane.xlu0 %1051
        %v1053 = vsub.f32 %v1049, %v1052
        %v1054 = vmul.f32 %v1053, 1.442695
        %v1055 = vpow.pop %v1054
        %v1056 = vsel %vm905, %v1055, 0.0
        %1057 = vadd.xlane.f32.xlu0 %v1056
        %v1058 = vpop.xlane.xlu0 %1057
        %v1059 = vrcp.pop %v1058
        %v1060 = vmul.f32 %v1055, %v1059
        %v1061 = vpack.c.bf16 %v1060, %v1060
        %v1062 = vlaneseq
        %v1063 = vshrl.u32 %v1062, 7
        %v1064 = vsub.s32 3, %v1063
        %v1065 = vrot.slane %v537, %v1064
        %v1067 = vsel %vm905, %v1061, 0
        %v1069 = vsel %vm925, %v991, 0
        %1071 = vmatprep.subr.bf16.mxu0 0
        %1072 = vmatpush1.bf16.msra.mxu0 0
        %1073 = vmatprep.subr.bf16.mxu0 0
        %1074 = vmatpush1.bf16.msra.mxu0 0
        %1075 = vmatprep.subr.bf16.mxu0 0
        %1076 = vmatpush1.bf16.msra.mxu0 0
        %1077 = vmatprep.subr.bf16.mxu0 0
        %1078 = vmatpush1.bf16.msra.mxu0 0
        %1079 = vmatprep.subr.bf16.mxu0 0
        %1080 = vmatpush1.bf16.msra.mxu0 0
        %1081 = vmatprep.subr.bf16.mxu0 0
        %1082 = vmatpush1.bf16.msra.mxu0 0
        %1083 = vmatprep.subr.bf16.mxu0 0
        %1084 = vmatpush1.bf16.msra.mxu0 0
        %1085 = vmatprep.subr.bf16.mxu0 0
        %1086 = vmatpush1.bf16.msra.mxu0 %v1069
        %1087 = vmatprep.subr.bf16.mxu0 0
        %1088 = vmatpush2.bf16.msra.mxu0 0
        %1089 = vmatprep.subr.bf16.mxu0 0
        %1090 = vmatpush2.bf16.msra.mxu0 0
        %1091 = vmatprep.subr.bf16.mxu0 0
        %1092 = vmatpush2.bf16.msra.mxu0 0
        %1093 = vmatprep.subr.bf16.mxu0 0
        %1094 = vmatpush2.bf16.msra.mxu0 0
        %1095 = vmatprep.subr.bf16.mxu0 0
        %1096 = vmatpush2.bf16.msra.mxu0 0
        %1097 = vmatprep.subr.bf16.mxu0 0
        %1098 = vmatpush2.bf16.msra.mxu0 0
        %1099 = vmatprep.subr.bf16.mxu0 0
        %1100 = vmatpush2.bf16.msra.mxu0 0
        %1101 = vmatprep.subr.bf16.mxu0 0
        %1102 = vmatpush2.bf16.msra.mxu0 0
        %1103 = vmatprep.mubr.bf16.mxu0 0
        %1104 = vmatmul.mubr.bf16.gmra.mxu0 %v1067
        %v1105 = vpop.f32.mrf.mxu0
        %v1106 = vadd.f32 %v1065, %v1105
        %v1107 = vpop.f32.mrf.mxu0
        %v1108 = vpop.f32.mrf.mxu0
        %v1109 = vpop.f32.mrf.mxu0
        %1110 = vdwg.mxu0
        %s1111 = scalar_lea.vmem %s1, %s404
        %v1112 = vld [vmem:[%s1111] sm:$0xff]
        %s1113 = scalar_lea.vmem %s2, %s404
        %v1114 = vld [vmem:[%s1113] sm:$0xff]
        %v1115 = vld [vmem:[%s8] sm:$0xf]
        %s1116 = sld [smem:[#allocation4]]
        %s1117 = sld [smem:[#allocation4 + $0x1]]
        %v1118 = vlaneseq
        %v1119 = vshrl.u32 %v1118, 7
        %v1120 = vsub.s32 0, %v1119
        %v1121 = vrot.slane %v1115, %v1120
        %v1122 = vmul.f32 %v1112, %v1121
        %v1123 = vlaneseq
        %v1124 = vshrl.u32 %v1123, 7
        %v1125 = vsub.s32 1, %v1124
        %v1126 = vrot.slane %v1115, %v1125
        %v1127 = vmul.f32 %v825, %v1126
        %v1128 = vadd.f32 %v1122, %v1127
        %v1129 = vsel %vm557, %v1128, 0.0
        %1130 = vadd.xlane.f32.xlu0 %v1129
        %v1131 = vpop.xlane.xlu0 %1130
        %v1132 = vstv %s1116
        %v1133 = vadd.f32 %v1131, %v1132
        %v1134 = vlaneseq
        %v1135 = vshrl.u32 %v1134, 7
        %v1136 = vsub.s32 2, %v1135
        %v1137 = vrot.slane %v1115, %v1136
        %v1138 = vmul.f32 %v1112, %v1137
        %v1139 = vlaneseq
        %v1140 = vshrl.u32 %v1139, 7
        %v1141 = vsub.s32 3, %v1140
        %v1142 = vrot.slane %v1115, %v1141
        %v1143 = vmul.f32 %v1106, %v1142
        %v1144 = vadd.f32 %v1138, %v1143
        %v1145 = vsel %vm557, %v1144, 0.0
        %1146 = vadd.xlane.f32.xlu0 %v1145
        %v1147 = vpop.xlane.xlu0 %1146
        %v1148 = vstv %s1117
        %v1149 = vadd.f32 %v1147, %v1148
        %v1150 = vmax.f32 %v1133, %v1149
        %v1151 = vsub.f32 %v1133, %v1150
        %v1152 = vmul.f32 %v1151, 1.442695
        %v1153 = vpow.pop %v1152
        %v1154 = vsub.f32 %v1149, %v1150
        %v1155 = vmul.f32 %v1154, 1.442695
        %v1156 = vpow.pop %v1155
        %v1157 = vadd.f32 %v1153, %v1156
        %v1158 = vrcp.pop %v1157
        %v1159 = vmul.f32 %v1153, %v1158
        %v1160 = vmul.f32 %v1159, %v825
        %v1161 = vmul.f32 %v1156, %v1158
        %v1162 = vmul.f32 %v1161, %v1106
        %v1163 = vadd.f32 %v1160, %v1162
        %v1164 = vlaneseq
        %v1165 = vshrl.u32 %v1164, 7
        %v1166 = vstv %s404
        %v1167 = vadd.s32 %v1166, %v1165
        %vm1168 = vcmp.lt.s32.totalorder %v1167, 6
        %v1169 = vsel %vm1168, 1, 0
        %vm1170 = vcmp.eq.s32.totalorder %v1169, 1
        %v1171 = vsel %vm1170, %v1163, %v683
        %v1172 = vadd.f32 %v1112, %v1171
        %1173 = vst.msk [vmem:[%s398] sm:$0xff] %vm557, %v1172
        %v1174 = vadd.f32 %v1114, %v963
        %1175 = vst.msk [vmem:[%s402] sm:$0xff] %vm557, %v1174
        %p1176 = scmp.lt.s32.totalorder %s23, 1
        %s1177 = scalar_select %p1176, %s23, 1
        %s1178 = smul.addr %s1177, 8
        %s1179 = scalar_lea.vmem %s9, %s1178
        %p1180 = scmp.lt.s32.totalorder %s23, 1
        %s1181 = scalar_select %p1180, %s23, 1
        %s1182 = smul.addr %s1181, 8
        %s1183 = scalar_lea.vmem %s10, %s1182
        // Predicated region
        $region65: #{tpu_custom_call.1} parent=55 // pred_check
          %p1184 = pneg %p240
        $region66: #{tpu_custom_call.1} parent=55 // pred_check_branch
          %1186 = sbr.rel (%p1184) target = $region68
        $region67: #{tpu_custom_call.1} parent=55 // pred_region
          _
        $region68: #{tpu_custom_call.1} parent=55 // pred_fallthru
          _
        // Predicated region
        $region69: #{tpu_custom_call.1} parent=55 // pred_check
          %p1187 = pneg %p266
        $region70: #{tpu_custom_call.1} parent=55 // pred_check_branch
          %1189 = sbr.rel (%p1187) target = $region72
        $region71: #{tpu_custom_call.1} parent=55 // pred_region
          _
        $region72: #{tpu_custom_call.1} parent=55 // pred_fallthru
          _
      $region56: #{tpu_custom_call.1} parent=5 // pred_fallthru
        _
      %p1190 = scmp.le.s32.totalorder 2, %s18
      // Predicated region
      $region73: #{tpu_custom_call.1} parent=5 // pred_check
        %p1191 = pneg %p1190
      $region74: #{tpu_custom_call.1} parent=5 // pred_check_branch
        %1193 = sbr.rel (%p1191) target = $region76
      $region75: #{tpu_custom_call.1} parent=5 // pred_region
        %s1194 = ssub.s32 %s18, 2
        // Predicated region
        $region77: #{tpu_custom_call.1} parent=75 // pred_check
          %p1195 = pneg %p246
        $region78: #{tpu_custom_call.1} parent=75 // pred_check_branch
          %1197 = sbr.rel (%p1195) target = $region80
        $region79: #{tpu_custom_call.1} parent=75 // pred_region
          %p1198 = scmp.lt.s32.totalorder %s24, 1
          %s1199 = scalar_select %p1198, %s24, 1
          %s1200 = smul.addr %s1199, 8
          %s1201 = scalar_lea.vmem %s9, %s1200
        $region80: #{tpu_custom_call.1} parent=75 // pred_fallthru
          _
        // Predicated region
        $region81: #{tpu_custom_call.1} parent=75 // pred_check
          %p1202 = pneg %p272
        $region82: #{tpu_custom_call.1} parent=75 // pred_check_branch
          %1204 = sbr.rel (%p1202) target = $region84
        $region83: #{tpu_custom_call.1} parent=75 // pred_region
          %p1205 = scmp.lt.s32.totalorder %s24, 1
          %s1206 = scalar_select %p1205, %s24, 1
          %s1207 = smul.addr %s1206, 8
          %s1208 = scalar_lea.vmem %s10, %s1207
        $region84: #{tpu_custom_call.1} parent=75 // pred_fallthru
          _
      $region76: #{tpu_custom_call.1} parent=5 // pred_fallthru
        _
    $region6: #{tpu_custom_call.1} parent=1 // loop_footer
      %s22 = sadd.s32 1, %s18
    $region7: #{tpu_custom_call.1} parent=1 // loop_footer_branch
      %17 = sbr.rel target = $region3
    $region8: #{tpu_custom_call.1} parent=1 // loop_exit
      _
    %1209 = vsyncpa [#allocation5], 1
    %s1210 = scalar_lea.sflag [#allocation5], 1
    %1211 = vsyncpa %s1210, 1

</llo_original>
